<compile_context>
chip_gen: v7x
topology: tpu7x:2x2x1
jax: 0.10.0
libtpu: 0.0.40
codegen_flags: <defaults>
</compile_context>

<pallas_src>
import functools

import jax
import jax.numpy as jnp
from jax import lax
from jax.experimental import pallas as pl
from jax.experimental.pallas import tpu as pltpu


# ----------------------------------------------------------------------------
# Fused kernel: LIF (both channel planes) -> reflect-pad depthwise conv -> +shift
# Grid: (bc_blocks, T); T runs sequentially, membranes persist in VMEM scratch.
# ----------------------------------------------------------------------------
def _pixel_attn_kernel(x_ref, p_ref, w0_ref, w1_ref, b_ref, o_ref,
                       vx_ref, vp_ref, *, tau, v_th, n):
    @pl.when(pl.program_id(1) == 0)
    def _():                                        # membranes start at v_reset = 0
        vx_ref[...] = jnp.zeros_like(vx_ref)
        vp_ref[...] = jnp.zeros_like(vp_ref)

    inv_tau = 1.0 / tau

    def lif_step(inp, v_ref):
        v = v_ref[...]
        v = v + (inp - v) * inv_tau                 # charge (decay_input=True, v_reset=0)
        spike = (v >= v_th).astype(jnp.float32)
        v_ref[...] = jnp.where(spike > 0.0, 0.0, v)  # hard reset
        return spike

    sx = lif_step(x_ref[0], vx_ref)                 # (BCblk, N) spikes of the x-plane
    sp = lif_step(p_ref[0], vp_ref)                 # (BCblk, N) spikes of the pattn1-plane

    def reflect_pad3(a):                            # torch 'reflect' (edge not repeated)
        return jnp.concatenate(
            [a[:, 3:4], a[:, 2:3], a[:, 1:2], a,
             a[:, n - 2:n - 1], a[:, n - 3:n - 2], a[:, n - 4:n - 3]], axis=1)

    px = reflect_pad3(sx)                           # (BCblk, N + 6)
    pp = reflect_pad3(sp)

    # 7-tap depthwise (grouped) conv; BN scale already folded into the taps.
    acc = w0_ref[0] * px[:, 0:n] + w1_ref[0] * pp[:, 0:n]
    for j in range(1, 7):                           # statically unrolled, pure VPU
        acc = acc + w0_ref[j] * px[:, j:j + n] + w1_ref[j] * pp[:, j:j + n]

    # folded (conv bias + BatchNorm1d shift) per-channel column, lane-broadcast
    o_ref[0] = acc + b_ref[...]


# ----------------------------------------------------------------------------
# Wrapper
# ----------------------------------------------------------------------------
def pixel_attention_snn(x, pattn1, params, *, tau=2.0, v_threshold=1.0, bn_eps=1e-5):
    """x, pattn1: (T, B, C, N) float32 -> (T, B, C, N) float32."""
    T, B, C, N = x.shape
    BC = B * C
    if N < 4:
        raise ValueError("reflect padding of 3 requires N >= 4")

    w = params["pa2_weight"].astype(jnp.float32)       # (C, 2, 7)
    bias = params["pa2_bias"].astype(jnp.float32)      # (C,)
    gamma = params["bn_weight"].astype(jnp.float32)
    beta = params["bn_bias"].astype(jnp.float32)
    mean = params["bn_running_mean"].astype(jnp.float32)
    var = params["bn_running_var"].astype(jnp.float32)

    scale = gamma / jnp.sqrt(var + bn_eps)             # (C,)
    shift = beta - mean * scale + bias * scale         # conv bias folded into BN shift
    w_s = w * scale[:, None, None]                     # fold BN scale into conv taps

    # per-(batch, channel) row b*C + c; tap-major weight layout (7, BC, 1)
    w0 = jnp.transpose(jnp.tile(w_s[:, 0, :], (B, 1))).reshape(7, BC, 1)  # vs x-plane
    w1 = jnp.transpose(jnp.tile(w_s[:, 1, :], (B, 1))).reshape(7, BC, 1)  # vs pattn1-plane
    b_col = jnp.tile(shift, (B,)).reshape(BC, 1)

    xf = x.reshape(T, BC, N).astype(jnp.float32)
    pf = pattn1.reshape(T, BC, N).astype(jnp.float32)

    # Block the B*C row axis: leading grid axis is "parallel" (LIF state is
    # independent per row) so megacore can shard it; keep blocks a multiple of
    # 8 sublanes and of modest VMEM size.
    bc_blk = BC
    if BC % 16 == 0:
        bc_blk = BC // 2
    while bc_blk > 1024 and bc_blk % 16 == 0:
        bc_blk //= 2
    n_bc = BC // bc_blk

    kern = functools.partial(_pixel_attn_kernel, tau=tau, v_th=v_threshold, n=N)
    out = pl.pallas_call(
        kern,
        out_shape=jax.ShapeDtypeStruct((T, BC, N), jnp.float32),
        grid=(n_bc, T),
        in_specs=[
            pl.BlockSpec((1, bc_blk, N), lambda b, t: (t, b, 0)),
            pl.BlockSpec((1, bc_blk, N), lambda b, t: (t, b, 0)),
            pl.BlockSpec((7, bc_blk, 1), lambda b, t: (0, b, 0)),
            pl.BlockSpec((7, bc_blk, 1), lambda b, t: (0, b, 0)),
            pl.BlockSpec((bc_blk, 1), lambda b, t: (b, 0)),
        ],
        out_specs=pl.BlockSpec((1, bc_blk, N), lambda b, t: (t, b, 0)),
        scratch_shapes=[pltpu.VMEM((bc_blk, N), jnp.float32),   # x-plane membrane
                        pltpu.VMEM((bc_blk, N), jnp.float32)],  # pattn1-plane membrane
        # row-blocks are independent ("parallel"); T must run sequentially
        # because the LIF state is carried in VMEM scratch ("arbitrary").
        compiler_params=pltpu.CompilerParams(
            dimension_semantics=("parallel", "arbitrary")),
    )(xf, pf, w0, w1, b_col)
    return out.reshape(T, B, C, N)


# ----------------------------------------------------------------------------
# Pure-JAX reference (mirrors the PyTorch ops) for a correctness check
# ----------------------------------------------------------------------------
def pixel_attention_snn_reference(x, pattn1, params, *, tau=2.0, v_threshold=1.0,
                                  bn_eps=1e-5):
    T, B, C, N = x.shape
    w = params["pa2_weight"]
    bias = params["pa2_bias"]
    gamma, beta = params["bn_weight"], params["bn_bias"]
    mean, var = params["bn_running_mean"], params["bn_running_var"]

    # interleave channels: 2c -> x_c, 2c+1 -> pattn1_c
    x2 = jnp.stack([x, pattn1], axis=3).reshape(T, B, 2 * C, N)

    def lif_step(v, xt):
        v = v + (xt - v) * (1.0 / tau)
        s = (v >= v_threshold).astype(jnp.float32)
        v = jnp.where(s > 0.0, 0.0, v)
        return v, s

    v0 = jnp.zeros((B, 2 * C, N), jnp.float32)
    _, spikes = lax.scan(lif_step, v0, x2)                     # (T, B, 2C, N)

    s_flat = spikes.reshape(T * B, 2 * C, N)
    s_pad = jnp.pad(s_flat, ((0, 0), (0, 0), (3, 3)), mode="reflect")
    conv = lax.conv_general_dilated(
        s_pad, w, window_strides=(1,), padding="VALID",
        dimension_numbers=("NCH", "OIH", "NCH"),
        feature_group_count=C, precision=lax.Precision.HIGHEST)
    conv = conv + bias[None, :, None]
    scale = gamma / jnp.sqrt(var + bn_eps)
    shift = beta - mean * scale
    out = conv * scale[None, :, None] + shift[None, :, None]
    return out.reshape(T, B, C, N)


# ----------------------------------------------------------------------------
if __name__ == "__main__":
    key = jax.random.PRNGKey(0)
    T, B, C, N = 4, 2, 16, 128          # dim=16, sequence length 128 (lane-dense)

    k1, k2, k3, k4, k5, k6, k7, k8 = jax.random.split(key, 8)
    x = jax.random.normal(k1, (T, B, C, N), jnp.float32)
    pattn1 = jax.random.normal(k2, (T, B, C, N), jnp.float32)

    params = {
        "pa2_weight": 0.3 * jax.random.normal(k3, (C, 2, 7), jnp.float32),
        "pa2_bias": 0.1 * jax.random.normal(k4, (C,), jnp.float32),
        "bn_weight": 1.0 + 0.1 * jax.random.normal(k5, (C,), jnp.float32),
        "bn_bias": 0.1 * jax.random.normal(k6, (C,), jnp.float32),
        "bn_running_mean": 0.1 * jax.random.normal(k7, (C,), jnp.float32),
        "bn_running_var": 1.0 + 0.1 * jax.random.uniform(k8, (C,), jnp.float32),
    }

    fwd = jax.jit(pixel_attention_snn)
    out = fwd(x, pattn1, params)
    jax.block_until_ready(out)

    assert out.shape == (T, B, C, N)
    assert bool(jnp.all(jnp.isfinite(out)))

    ref = pixel_attention_snn_reference(x, pattn1, params)
    max_err = float(jnp.max(jnp.abs(out - ref)))
    assert max_err < 1e-3, f"max abs error vs reference: {max_err}"

    print("KERNEL_OK")
</pallas_src>

<mosaic_0001>
module attributes {stable_mosaic.version = 11 : i64} {
  func.func @_pixel_attn_kernel(%arg0: i32, %arg1: i32, %arg2: memref<1x16x128xf32, #tpu.memory_space<vmem>>, %arg3: memref<1x16x128xf32, #tpu.memory_space<vmem>>, %arg4: memref<7x16x1xf32, #tpu.memory_space<vmem>>, %arg5: memref<7x16x1xf32, #tpu.memory_space<vmem>>, %arg6: memref<16x1xf32, #tpu.memory_space<vmem>>, %arg7: memref<1x16x128xf32, #tpu.memory_space<vmem>>, %arg8: memref<16x128xf32, #tpu.memory_space<vmem>>, %arg9: memref<16x128xf32, #tpu.memory_space<vmem>>) attributes {dimension_semantics = [#tpu.dimension_semantics<parallel>, #tpu.dimension_semantics<arbitrary>], iteration_bounds = array<i64: 2, 4>, scalar_prefetch = 0 : i64, scratch_operands = 2 : i64, tpu.core_type = #tpu.core_type<tc>, window_params = [{transform_indices = @transform_0, window_bounds = array<i64: 1, 16, 128>}, {transform_indices = @transform_1, window_bounds = array<i64: 1, 16, 128>}, {transform_indices = @transform_2, window_bounds = array<i64: 7, 16, 1>}, {transform_indices = @transform_3, window_bounds = array<i64: 7, 16, 1>}, {transform_indices = @transform_4, window_bounds = array<i64: 16, 1>}, {transform_indices = @transform_5, window_bounds = array<i64: 1, 16, 128>}]} {
    %c0_i32 = arith.constant 0 : i32
    %0 = arith.cmpi eq, %arg1, %c0_i32 : i32
    %1 = arith.extui %0 : i1 to i32
    %c0_i32_0 = arith.constant 0 : i32
    %2 = arith.cmpi ne, %1, %c0_i32_0 : i32
    scf.if %2 {
      %cst_62 = arith.constant 0.000000e+00 : f32
      %138 = vector.broadcast %cst_62 : f32 to vector<16x128xf32>
      %c0_63 = arith.constant 0 : index
      %c0_64 = arith.constant 0 : index
      %139 = vector.load %arg8[%c0_63, %c0_64] : memref<16x128xf32, #tpu.memory_space<vmem>>, vector<16x128xf32>
      tpu.vector_store %arg8[%c0_63, %c0_64], %138 {strides = array<i32>} : memref<16x128xf32, #tpu.memory_space<vmem>>, vector<16x128xf32>,
      %cst_65 = arith.constant 0.000000e+00 : f32
      %140 = vector.broadcast %cst_65 : f32 to vector<16x128xf32>
      %c0_66 = arith.constant 0 : index
      %c0_67 = arith.constant 0 : index
      %141 = vector.load %arg9[%c0_66, %c0_67] : memref<16x128xf32, #tpu.memory_space<vmem>>, vector<16x128xf32>
      tpu.vector_store %arg9[%c0_66, %c0_67], %140 {strides = array<i32>} : memref<16x128xf32, #tpu.memory_space<vmem>>, vector<16x128xf32>,
    } else {
    }
    %c0 = arith.constant 0 : index
    %c0_1 = arith.constant 0 : index
    %c0_2 = arith.constant 0 : index
    %3 = vector.load %arg2[%c0, %c0_1, %c0_2] : memref<1x16x128xf32, #tpu.memory_space<vmem>>, vector<1x16x128xf32>
    %4 = vector.shape_cast %3 : vector<1x16x128xf32> to vector<16x128xf32>
    %c0_3 = arith.constant 0 : index
    %c0_4 = arith.constant 0 : index
    %5 = vector.load %arg8[%c0_3, %c0_4] : memref<16x128xf32, #tpu.memory_space<vmem>>, vector<16x128xf32>
    %6 = arith.subf %4, %5 : vector<16x128xf32>
    %cst = arith.constant 5.000000e-01 : f32
    %7 = vector.broadcast %cst : f32 to vector<16x128xf32>
    %8 = arith.mulf %6, %7 : vector<16x128xf32>
    %9 = arith.addf %5, %8 : vector<16x128xf32>
    %cst_5 = arith.constant 1.000000e+00 : f32
    %10 = vector.broadcast %cst_5 : f32 to vector<16x128xf32>
    %11 = arith.cmpf oge, %9, %10 : vector<16x128xf32>
    %12 = arith.extui %11 : vector<16x128xi1> to vector<16x128xi32>
    %13 = arith.sitofp %12 : vector<16x128xi32> to vector<16x128xf32>
    %cst_6 = arith.constant 0.000000e+00 : f32
    %14 = vector.broadcast %cst_6 : f32 to vector<16x128xf32>
    %15 = arith.cmpf ogt, %13, %14 : vector<16x128xf32>
    %cst_7 = arith.constant 0.000000e+00 : f32
    %16 = vector.broadcast %cst_7 : f32 to vector<16x128xf32>
    %17 = arith.select %15, %16, %9 : vector<16x128xi1>, vector<16x128xf32>
    %c0_8 = arith.constant 0 : index
    %c0_9 = arith.constant 0 : index
    %18 = vector.load %arg8[%c0_8, %c0_9] : memref<16x128xf32, #tpu.memory_space<vmem>>, vector<16x128xf32>
    tpu.vector_store %arg8[%c0_8, %c0_9], %17 {strides = array<i32>} : memref<16x128xf32, #tpu.memory_space<vmem>>, vector<16x128xf32>,
    %c0_10 = arith.constant 0 : index
    %c0_11 = arith.constant 0 : index
    %c0_12 = arith.constant 0 : index
    %19 = vector.load %arg3[%c0_10, %c0_11, %c0_12] : memref<1x16x128xf32, #tpu.memory_space<vmem>>, vector<1x16x128xf32>
    %20 = vector.shape_cast %19 : vector<1x16x128xf32> to vector<16x128xf32>
    %c0_13 = arith.constant 0 : index
    %c0_14 = arith.constant 0 : index
    %21 = vector.load %arg9[%c0_13, %c0_14] : memref<16x128xf32, #tpu.memory_space<vmem>>, vector<16x128xf32>
    %22 = arith.subf %20, %21 : vector<16x128xf32>
    %cst_15 = arith.constant 5.000000e-01 : f32
    %23 = vector.broadcast %cst_15 : f32 to vector<16x128xf32>
    %24 = arith.mulf %22, %23 : vector<16x128xf32>
    %25 = arith.addf %21, %24 : vector<16x128xf32>
    %cst_16 = arith.constant 1.000000e+00 : f32
    %26 = vector.broadcast %cst_16 : f32 to vector<16x128xf32>
    %27 = arith.cmpf oge, %25, %26 : vector<16x128xf32>
    %28 = arith.extui %27 : vector<16x128xi1> to vector<16x128xi32>
    %29 = arith.sitofp %28 : vector<16x128xi32> to vector<16x128xf32>
    %cst_17 = arith.constant 0.000000e+00 : f32
    %30 = vector.broadcast %cst_17 : f32 to vector<16x128xf32>
    %31 = arith.cmpf ogt, %29, %30 : vector<16x128xf32>
    %cst_18 = arith.constant 0.000000e+00 : f32
    %32 = vector.broadcast %cst_18 : f32 to vector<16x128xf32>
    %33 = arith.select %31, %32, %25 : vector<16x128xi1>, vector<16x128xf32>
    %c0_19 = arith.constant 0 : index
    %c0_20 = arith.constant 0 : index
    %34 = vector.load %arg9[%c0_19, %c0_20] : memref<16x128xf32, #tpu.memory_space<vmem>>, vector<16x128xf32>
    tpu.vector_store %arg9[%c0_19, %c0_20], %33 {strides = array<i32>} : memref<16x128xf32, #tpu.memory_space<vmem>>, vector<16x128xf32>,
    %35 = vector.extract_strided_slice %13 {offsets = [0, 3], sizes = [16, 1], strides = [1, 1]} : vector<16x128xf32> to vector<16x1xf32>
    %36 = vector.extract_strided_slice %13 {offsets = [0, 2], sizes = [16, 1], strides = [1, 1]} : vector<16x128xf32> to vector<16x1xf32>
    %37 = vector.extract_strided_slice %13 {offsets = [0, 1], sizes = [16, 1], strides = [1, 1]} : vector<16x128xf32> to vector<16x1xf32>
    %38 = vector.extract_strided_slice %13 {offsets = [0, 126], sizes = [16, 1], strides = [1, 1]} : vector<16x128xf32> to vector<16x1xf32>
    %39 = vector.extract_strided_slice %13 {offsets = [0, 125], sizes = [16, 1], strides = [1, 1]} : vector<16x128xf32> to vector<16x1xf32>
    %40 = vector.extract_strided_slice %13 {offsets = [0, 124], sizes = [16, 1], strides = [1, 1]} : vector<16x128xf32> to vector<16x1xf32>
    %41 = tpu.concatenate %35, %36, %37, %13, %38, %39, %40 in 1 : vector<16x1xf32>, vector<16x1xf32>, vector<16x1xf32>, vector<16x128xf32>, vector<16x1xf32>, vector<16x1xf32>, vector<16x1xf32> -> vector<16x134xf32>
    %42 = vector.extract_strided_slice %29 {offsets = [0, 3], sizes = [16, 1], strides = [1, 1]} : vector<16x128xf32> to vector<16x1xf32>
    %43 = vector.extract_strided_slice %29 {offsets = [0, 2], sizes = [16, 1], strides = [1, 1]} : vector<16x128xf32> to vector<16x1xf32>
    %44 = vector.extract_strided_slice %29 {offsets = [0, 1], sizes = [16, 1], strides = [1, 1]} : vector<16x128xf32> to vector<16x1xf32>
    %45 = vector.extract_strided_slice %29 {offsets = [0, 126], sizes = [16, 1], strides = [1, 1]} : vector<16x128xf32> to vector<16x1xf32>
    %46 = vector.extract_strided_slice %29 {offsets = [0, 125], sizes = [16, 1], strides = [1, 1]} : vector<16x128xf32> to vector<16x1xf32>
    %47 = vector.extract_strided_slice %29 {offsets = [0, 124], sizes = [16, 1], strides = [1, 1]} : vector<16x128xf32> to vector<16x1xf32>
    %48 = tpu.concatenate %42, %43, %44, %29, %45, %46, %47 in 1 : vector<16x1xf32>, vector<16x1xf32>, vector<16x1xf32>, vector<16x128xf32>, vector<16x1xf32>, vector<16x1xf32>, vector<16x1xf32> -> vector<16x134xf32>
    %c0_21 = arith.constant 0 : index
    %c0_22 = arith.constant 0 : index
    %c0_23 = arith.constant 0 : index
    %49 = vector.load %arg4[%c0_21, %c0_22, %c0_23] : memref<7x16x1xf32, #tpu.memory_space<vmem>>, vector<1x16x1xf32>
    %50 = vector.shape_cast %49 : vector<1x16x1xf32> to vector<16x1xf32>
    %51 = vector.extract_strided_slice %41 {offsets = [0, 0], sizes = [16, 128], strides = [1, 1]} : vector<16x134xf32> to vector<16x128xf32>
    %52 = vector.broadcast %50 : vector<16x1xf32> to vector<16x128xf32>
    %53 = arith.mulf %52, %51 : vector<16x128xf32>
    %c0_24 = arith.constant 0 : index
    %c0_25 = arith.constant 0 : index
    %c0_26 = arith.constant 0 : index
    %54 = vector.load %arg5[%c0_24, %c0_25, %c0_26] : memref<7x16x1xf32, #tpu.memory_space<vmem>>, vector<1x16x1xf32>
    %55 = vector.shape_cast %54 : vector<1x16x1xf32> to vector<16x1xf32>
    %56 = vector.extract_strided_slice %48 {offsets = [0, 0], sizes = [16, 128], strides = [1, 1]} : vector<16x134xf32> to vector<16x128xf32>
    %57 = vector.broadcast %55 : vector<16x1xf32> to vector<16x128xf32>
    %58 = arith.mulf %57, %56 : vector<16x128xf32>
    %59 = arith.addf %53, %58 : vector<16x128xf32>
    %c1 = arith.constant 1 : index
    %c0_27 = arith.constant 0 : index
    %c0_28 = arith.constant 0 : index
    %60 = vector.load %arg4[%c1, %c0_27, %c0_28] : memref<7x16x1xf32, #tpu.memory_space<vmem>>, vector<1x16x1xf32>
    %61 = vector.shape_cast %60 : vector<1x16x1xf32> to vector<16x1xf32>
    %62 = vector.extract_strided_slice %41 {offsets = [0, 1], sizes = [16, 128], strides = [1, 1]} : vector<16x134xf32> to vector<16x128xf32>
    %63 = vector.broadcast %61 : vector<16x1xf32> to vector<16x128xf32>
    %64 = arith.mulf %63, %62 : vector<16x128xf32>
    %65 = arith.addf %59, %64 : vector<16x128xf32>
    %c1_29 = arith.constant 1 : index
    %c0_30 = arith.constant 0 : index
    %c0_31 = arith.constant 0 : index
    %66 = vector.load %arg5[%c1_29, %c0_30, %c0_31] : memref<7x16x1xf32, #tpu.memory_space<vmem>>, vector<1x16x1xf32>
    %67 = vector.shape_cast %66 : vector<1x16x1xf32> to vector<16x1xf32>
    %68 = vector.extract_strided_slice %48 {offsets = [0, 1], sizes = [16, 128], strides = [1, 1]} : vector<16x134xf32> to vector<16x128xf32>
    %69 = vector.broadcast %67 : vector<16x1xf32> to vector<16x128xf32>
    %70 = arith.mulf %69, %68 : vector<16x128xf32>
    %71 = arith.addf %65, %70 : vector<16x128xf32>
    %c2 = arith.constant 2 : index
    %c0_32 = arith.constant 0 : index
    %c0_33 = arith.constant 0 : index
    %72 = vector.load %arg4[%c2, %c0_32, %c0_33] : memref<7x16x1xf32, #tpu.memory_space<vmem>>, vector<1x16x1xf32>
    %73 = vector.shape_cast %72 : vector<1x16x1xf32> to vector<16x1xf32>
    %74 = vector.extract_strided_slice %41 {offsets = [0, 2], sizes = [16, 128], strides = [1, 1]} : vector<16x134xf32> to vector<16x128xf32>
    %75 = vector.broadcast %73 : vector<16x1xf32> to vector<16x128xf32>
    %76 = arith.mulf %75, %74 : vector<16x128xf32>
    %77 = arith.addf %71, %76 : vector<16x128xf32>
    %c2_34 = arith.constant 2 : index
    %c0_35 = arith.constant 0 : index
    %c0_36 = arith.constant 0 : index
    %78 = vector.load %arg5[%c2_34, %c0_35, %c0_36] : memref<7x16x1xf32, #tpu.memory_space<vmem>>, vector<1x16x1xf32>
    %79 = vector.shape_cast %78 : vector<1x16x1xf32> to vector<16x1xf32>
    %80 = vector.extract_strided_slice %48 {offsets = [0, 2], sizes = [16, 128], strides = [1, 1]} : vector<16x134xf32> to vector<16x128xf32>
    %81 = vector.broadcast %79 : vector<16x1xf32> to vector<16x128xf32>
    %82 = arith.mulf %81, %80 : vector<16x128xf32>
    %83 = arith.addf %77, %82 : vector<16x128xf32>
    %c3 = arith.constant 3 : index
    %c0_37 = arith.constant 0 : index
    %c0_38 = arith.constant 0 : index
    %84 = vector.load %arg4[%c3, %c0_37, %c0_38] : memref<7x16x1xf32, #tpu.memory_space<vmem>>, vector<1x16x1xf32>
    %85 = vector.shape_cast %84 : vector<1x16x1xf32> to vector<16x1xf32>
    %86 = vector.extract_strided_slice %41 {offsets = [0, 3], sizes = [16, 128], strides = [1, 1]} : vector<16x134xf32> to vector<16x128xf32>
    %87 = vector.broadcast %85 : vector<16x1xf32> to vector<16x128xf32>
    %88 = arith.mulf %87, %86 : vector<16x128xf32>
    %89 = arith.addf %83, %88 : vector<16x128xf32>
    %c3_39 = arith.constant 3 : index
    %c0_40 = arith.constant 0 : index
    %c0_41 = arith.constant 0 : index
    %90 = vector.load %arg5[%c3_39, %c0_40, %c0_41] : memref<7x16x1xf32, #tpu.memory_space<vmem>>, vector<1x16x1xf32>
    %91 = vector.shape_cast %90 : vector<1x16x1xf32> to vector<16x1xf32>
    %92 = vector.extract_strided_slice %48 {offsets = [0, 3], sizes = [16, 128], strides = [1, 1]} : vector<16x134xf32> to vector<16x128xf32>
    %93 = vector.broadcast %91 : vector<16x1xf32> to vector<16x128xf32>
    %94 = arith.mulf %93, %92 : vector<16x128xf32>
    %95 = arith.addf %89, %94 : vector<16x128xf32>
    %c4 = arith.constant 4 : index
    %c0_42 = arith.constant 0 : index
    %c0_43 = arith.constant 0 : index
    %96 = vector.load %arg4[%c4, %c0_42, %c0_43] : memref<7x16x1xf32, #tpu.memory_space<vmem>>, vector<1x16x1xf32>
    %97 = vector.shape_cast %96 : vector<1x16x1xf32> to vector<16x1xf32>
    %98 = vector.extract_strided_slice %41 {offsets = [0, 4], sizes = [16, 128], strides = [1, 1]} : vector<16x134xf32> to vector<16x128xf32>
    %99 = vector.broadcast %97 : vector<16x1xf32> to vector<16x128xf32>
    %100 = arith.mulf %99, %98 : vector<16x128xf32>
    %101 = arith.addf %95, %100 : vector<16x128xf32>
    %c4_44 = arith.constant 4 : index
    %c0_45 = arith.constant 0 : index
    %c0_46 = arith.constant 0 : index
    %102 = vector.load %arg5[%c4_44, %c0_45, %c0_46] : memref<7x16x1xf32, #tpu.memory_space<vmem>>, vector<1x16x1xf32>
    %103 = vector.shape_cast %102 : vector<1x16x1xf32> to vector<16x1xf32>
    %104 = vector.extract_strided_slice %48 {offsets = [0, 4], sizes = [16, 128], strides = [1, 1]} : vector<16x134xf32> to vector<16x128xf32>
    %105 = vector.broadcast %103 : vector<16x1xf32> to vector<16x128xf32>
    %106 = arith.mulf %105, %104 : vector<16x128xf32>
    %107 = arith.addf %101, %106 : vector<16x128xf32>
    %c5 = arith.constant 5 : index
    %c0_47 = arith.constant 0 : index
    %c0_48 = arith.constant 0 : index
    %108 = vector.load %arg4[%c5, %c0_47, %c0_48] : memref<7x16x1xf32, #tpu.memory_space<vmem>>, vector<1x16x1xf32>
    %109 = vector.shape_cast %108 : vector<1x16x1xf32> to vector<16x1xf32>
    %110 = vector.extract_strided_slice %41 {offsets = [0, 5], sizes = [16, 128], strides = [1, 1]} : vector<16x134xf32> to vector<16x128xf32>
    %111 = vector.broadcast %109 : vector<16x1xf32> to vector<16x128xf32>
    %112 = arith.mulf %111, %110 : vector<16x128xf32>
    %113 = arith.addf %107, %112 : vector<16x128xf32>
    %c5_49 = arith.constant 5 : index
    %c0_50 = arith.constant 0 : index
    %c0_51 = arith.constant 0 : index
    %114 = vector.load %arg5[%c5_49, %c0_50, %c0_51] : memref<7x16x1xf32, #tpu.memory_space<vmem>>, vector<1x16x1xf32>
    %115 = vector.shape_cast %114 : vector<1x16x1xf32> to vector<16x1xf32>
    %116 = vector.extract_strided_slice %48 {offsets = [0, 5], sizes = [16, 128], strides = [1, 1]} : vector<16x134xf32> to vector<16x128xf32>
    %117 = vector.broadcast %115 : vector<16x1xf32> to vector<16x128xf32>
    %118 = arith.mulf %117, %116 : vector<16x128xf32>
    %119 = arith.addf %113, %118 : vector<16x128xf32>
    %c6 = arith.constant 6 : index
    %c0_52 = arith.constant 0 : index
    %c0_53 = arith.constant 0 : index
    %120 = vector.load %arg4[%c6, %c0_52, %c0_53] : memref<7x16x1xf32, #tpu.memory_space<vmem>>, vector<1x16x1xf32>
    %121 = vector.shape_cast %120 : vector<1x16x1xf32> to vector<16x1xf32>
    %122 = vector.extract_strided_slice %41 {offsets = [0, 6], sizes = [16, 128], strides = [1, 1]} : vector<16x134xf32> to vector<16x128xf32>
    %123 = vector.broadcast %121 : vector<16x1xf32> to vector<16x128xf32>
    %124 = arith.mulf %123, %122 : vector<16x128xf32>
    %125 = arith.addf %119, %124 : vector<16x128xf32>
    %c6_54 = arith.constant 6 : index
    %c0_55 = arith.constant 0 : index
    %c0_56 = arith.constant 0 : index
    %126 = vector.load %arg5[%c6_54, %c0_55, %c0_56] : memref<7x16x1xf32, #tpu.memory_space<vmem>>, vector<1x16x1xf32>
    %127 = vector.shape_cast %126 : vector<1x16x1xf32> to vector<16x1xf32>
    %128 = vector.extract_strided_slice %48 {offsets = [0, 6], sizes = [16, 128], strides = [1, 1]} : vector<16x134xf32> to vector<16x128xf32>
    %129 = vector.broadcast %127 : vector<16x1xf32> to vector<16x128xf32>
    %130 = arith.mulf %129, %128 : vector<16x128xf32>
    %131 = arith.addf %125, %130 : vector<16x128xf32>
    %c0_57 = arith.constant 0 : index
    %c0_58 = arith.constant 0 : index
    %132 = vector.load %arg6[%c0_57, %c0_58] : memref<16x1xf32, #tpu.memory_space<vmem>>, vector<16x1xf32>
    %133 = vector.broadcast %132 : vector<16x1xf32> to vector<16x128xf32>
    %134 = arith.addf %131, %133 : vector<16x128xf32>
    %c0_59 = arith.constant 0 : index
    %c0_60 = arith.constant 0 : index
    %c0_61 = arith.constant 0 : index
    %135 = vector.load %arg7[%c0_59, %c0_60, %c0_61] : memref<1x16x128xf32, #tpu.memory_space<vmem>>, vector<1x16x128xf32>
    %136 = vector.shape_cast %135 : vector<1x16x128xf32> to vector<16x128xf32>
    %137 = vector.shape_cast %134 : vector<16x128xf32> to vector<1x16x128xf32>
    tpu.vector_store %arg7[%c0_59, %c0_60, %c0_61], %137 {strides = array<i32>} : memref<1x16x128xf32, #tpu.memory_space<vmem>>, vector<1x16x128xf32>,
    return
  }
  func.func @transform_0(%arg0: i32, %arg1: i32) -> (i32, i32, i32) {
    %c0_i32 = arith.constant 0 : i32
    %c0_i32_0 = arith.constant 0 : i32
    return %arg1, %arg0, %c0_i32 : i32, i32, i32
  }
  func.func @transform_1(%arg0: i32, %arg1: i32) -> (i32, i32, i32) {
    %c0_i32 = arith.constant 0 : i32
    %c0_i32_0 = arith.constant 0 : i32
    return %arg1, %arg0, %c0_i32 : i32, i32, i32
  }
  func.func @transform_2(%arg0: i32, %arg1: i32) -> (i32, i32, i32) {
    %c0_i32 = arith.constant 0 : i32
    %c0_i32_0 = arith.constant 0 : i32
    %c0_i32_1 = arith.constant 0 : i32
    return %c0_i32, %arg0, %c0_i32_0 : i32, i32, i32
  }
  func.func @transform_3(%arg0: i32, %arg1: i32) -> (i32, i32, i32) {
    %c0_i32 = arith.constant 0 : i32
    %c0_i32_0 = arith.constant 0 : i32
    %c0_i32_1 = arith.constant 0 : i32
    return %c0_i32, %arg0, %c0_i32_0 : i32, i32, i32
  }
  func.func @transform_4(%arg0: i32, %arg1: i32) -> (i32, i32) {
    %c0_i32 = arith.constant 0 : i32
    %c0_i32_0 = arith.constant 0 : i32
    return %arg0, %c0_i32 : i32, i32
  }
  func.func @transform_5(%arg0: i32, %arg1: i32) -> (i32, i32, i32) {
    %c0_i32 = arith.constant 0 : i32
    %c0_i32_0 = arith.constant 0 : i32
    return %arg1, %arg0, %c0_i32 : i32, i32, i32
  }
}

</mosaic_0001>

<llo_original>
// kernel: tile.24
$region0: #{tile.24}
  #allocation0 [shape = 's32[1]{0}', space=sflag, size = 0x4, scoped, tag = 'scoped memory for tile.24']
  %s0 = inlined_call_operand.vmem [shape: f32[16], index: 0, kind: input, shape index: {}]
  %s1 = inlined_call_operand.vmem [shape: f32[2,16], index: 1, kind: output, shape index: {}]
  // Predicated region
  $region2: #{tile.24} parent=0 // pred_check
    _
  $region3: #{tile.24} parent=0 // pred_check_branch
    %3 = sbr.rel (0) target = $region5
  $region4: #{tile.24} parent=0 // pred_region
    _
  $region5: #{tile.24} parent=0 // pred_fallthru
    _
  %v4 = vld [vmem:[%s0] ss:$0 sm:$0xff]
  %5 = vst [vmem:[%s1] sm:$0x3] %v4

// kernel: tile.20
$region0: #{tile.20}
  %s0 = inlined_call_operand.vmem [shape: f32[2,16,7], index: 0, kind: input, shape index: {}]
  %s1 = inlined_call_operand.vmem [shape: f32[32,7], index: 1, kind: output, shape index: {}]
  $region1: #{tile.20} parent=0
    #allocation0 [shape = 'u8[28672]{0}', space=vmem, size = 0x7000, scoped, tag = 'scoped mem for input reshape']
    %s3 = sshllo.u32 0, 2
    %s4 = smul.addr 2, 6
    %s5 = scalar_lea.vmem %s0, %s4
    %v6 = vld [vmem:[%s5] sm:%s3]
    %s7 = scalar_lea.vmem [#allocation0], 48
    %8 = vst [vmem:[%s7] sm:%s3] %v6
    %s9 = smul.addr 2, 5
    %s10 = scalar_lea.vmem %s0, %s9
    %v11 = vld [vmem:[%s10] sm:%s3]
    %s12 = scalar_lea.vmem [#allocation0], 40
    %13 = vst [vmem:[%s12] sm:%s3] %v11
    %s14 = smul.addr 2, 4
    %s15 = scalar_lea.vmem %s0, %s14
    %v16 = vld [vmem:[%s15] sm:%s3]
    %s17 = scalar_lea.vmem [#allocation0], 32
    %18 = vst [vmem:[%s17] sm:%s3] %v16
    %s19 = smul.addr 2, 3
    %s20 = scalar_lea.vmem %s0, %s19
    %v21 = vld [vmem:[%s20] sm:%s3]
    %s22 = scalar_lea.vmem [#allocation0], 24
    %23 = vst [vmem:[%s22] sm:%s3] %v21
    %s24 = smul.addr 2, 2
    %s25 = scalar_lea.vmem %s0, %s24
    %v26 = vld [vmem:[%s25] sm:%s3]
    %s27 = scalar_lea.vmem [#allocation0], 16
    %28 = vst [vmem:[%s27] sm:%s3] %v26
    %s29 = scalar_lea.vmem %s0, 2
    %v30 = vld [vmem:[%s29] sm:%s3]
    %s31 = scalar_lea.vmem [#allocation0], 8
    %32 = vst [vmem:[%s31] sm:%s3] %v30
    %v33 = vld [vmem:[%s0] sm:%s3]
    %34 = vst [vmem:[#allocation0] sm:%s3] %v33
    %v35 = vld [vmem:[#allocation0] ss:$8 sm:$0xf]
    %v36 = vld [vmem:[#allocation0] ss:$8 sm:$0x70]
    %vm37 = vcmask 1046532
    %v38 = vsel %vm37, %v36, %v35
    %vm39 = vcmask 130048
    %40 = vst.msk [vmem:[%s1] sm:$0x7f] %vm39, %v38
    %s41 = scalar_lea.vmem [#allocation0], 1
    %v42 = vld [vmem:[%s41] ss:$8 sm:$0xf]
    %s43 = scalar_lea.vmem [#allocation0], 1
    %v44 = vld [vmem:[%s43] ss:$8 sm:$0x70]
    %vm45 = vcmask 1046532
    %v46 = vsel %vm45, %v44, %v42
    %47 = vrot.lane.b32.xlu0 %v46, 16
    %v48 = vpop.permute.xlu0 %47
    %vm49 = vcmask 261248
    %50 = vst.msk [vmem:[%s1] sm:$0x7f] %vm49, %v48

// kernel: tile.0
$region0: #{tile.0}
  %s0 = inlined_call_operand.vmem [shape: f32[2,16], index: 0, kind: input, shape index: {}]
  %s1 = inlined_call_operand.vmem [shape: f32[32,1], index: 1, kind: output, shape index: {}]
  $region1: #{tile.0} parent=0
    #allocation0 [shape = 'u8[4096]{0}', space=vmem, size = 0x1000, scoped, tag = 'scoped mem for input reshape']
    %s3 = sshllo.u32 0, 2
    %v4 = vld [vmem:[%s0] sm:%s3]
    %5 = vst [vmem:[#allocation0] sm:%s3] %v4
    %v6 = vld [vmem:[#allocation0] sm:$0x3]
    %vm7 = vcmask 7168
    %8 = vst.msk [vmem:[%s1] ss:$16 sm:$0x3] %vm7, %v6
    %v9 = vld [vmem:[#allocation0] sm:$0x3]
    %10 = vrot.lane.b32.xlu0 %v9, 127
    %v11 = vpop.permute.xlu0 %10
    %vm12 = vcmask 7168
    %s13 = scalar_lea.vmem %s1, 1
    %14 = vst.msk [vmem:[%s13] ss:$16 sm:$0x3] %vm12, %v11
    %v15 = vld [vmem:[#allocation0] sm:$0x3]
    %16 = vrot.lane.b32.xlu0 %v15, 126
    %v17 = vpop.permute.xlu0 %16
    %vm18 = vcmask 7168
    %s19 = scalar_lea.vmem %s1, 2
    %20 = vst.msk [vmem:[%s19] ss:$16 sm:$0x3] %vm18, %v17
    %v21 = vld [vmem:[#allocation0] sm:$0x3]
    %22 = vrot.lane.b32.xlu0 %v21, 125
    %v23 = vpop.permute.xlu0 %22
    %vm24 = vcmask 7168
    %s25 = scalar_lea.vmem %s1, 3
    %26 = vst.msk [vmem:[%s25] ss:$16 sm:$0x3] %vm24, %v23
    %v27 = vld [vmem:[#allocation0] sm:$0x3]
    %28 = vrot.lane.b32.xlu0 %v27, 124
    %v29 = vpop.permute.xlu0 %28
    %vm30 = vcmask 7168
    %s31 = scalar_lea.vmem %s1, 4
    %32 = vst.msk [vmem:[%s31] ss:$16 sm:$0x3] %vm30, %v29
    %v33 = vld [vmem:[#allocation0] sm:$0x3]
    %34 = vrot.lane.b32.xlu0 %v33, 123
    %v35 = vpop.permute.xlu0 %34
    %vm36 = vcmask 7168
    %s37 = scalar_lea.vmem %s1, 5
    %38 = vst.msk [vmem:[%s37] ss:$16 sm:$0x3] %vm36, %v35
    %v39 = vld [vmem:[#allocation0] sm:$0x3]
    %40 = vrot.lane.b32.xlu0 %v39, 122
    %v41 = vpop.permute.xlu0 %40
    %vm42 = vcmask 7168
    %s43 = scalar_lea.vmem %s1, 6
    %44 = vst.msk [vmem:[%s43] ss:$16 sm:$0x3] %vm42, %v41
    %v45 = vld [vmem:[#allocation0] sm:$0x3]
    %46 = vrot.lane.b32.xlu0 %v45, 121
    %v47 = vpop.permute.xlu0 %46
    %vm48 = vcmask 7168
    %s49 = scalar_lea.vmem %s1, 7
    %50 = vst.msk [vmem:[%s49] ss:$16 sm:$0x3] %vm48, %v47
    %v51 = vld [vmem:[#allocation0] sm:$0x3]
    %52 = vrot.lane.b32.xlu0 %v51, 120
    %v53 = vpop.permute.xlu0 %52
    %vm54 = vcmask 7168
    %s55 = scalar_lea.vmem %s1, 8
    %56 = vst.msk [vmem:[%s55] ss:$16 sm:$0x3] %vm54, %v53
    %v57 = vld [vmem:[#allocation0] sm:$0x3]
    %58 = vrot.lane.b32.xlu0 %v57, 119
    %v59 = vpop.permute.xlu0 %58
    %vm60 = vcmask 7168
    %s61 = scalar_lea.vmem %s1, 9
    %62 = vst.msk [vmem:[%s61] ss:$16 sm:$0x3] %vm60, %v59
    %v63 = vld [vmem:[#allocation0] sm:$0x3]
    %64 = vrot.lane.b32.xlu0 %v63, 118
    %v65 = vpop.permute.xlu0 %64
    %vm66 = vcmask 7168
    %s67 = scalar_lea.vmem %s1, 10
    %68 = vst.msk [vmem:[%s67] ss:$16 sm:$0x3] %vm66, %v65
    %v69 = vld [vmem:[#allocation0] sm:$0x3]
    %70 = vrot.lane.b32.xlu0 %v69, 117
    %v71 = vpop.permute.xlu0 %70
    %vm72 = vcmask 7168
    %s73 = scalar_lea.vmem %s1, 11
    %74 = vst.msk [vmem:[%s73] ss:$16 sm:$0x3] %vm72, %v71
    %v75 = vld [vmem:[#allocation0] sm:$0x3]
    %76 = vrot.lane.b32.xlu0 %v75, 116
    %v77 = vpop.permute.xlu0 %76
    %vm78 = vcmask 7168
    %s79 = scalar_lea.vmem %s1, 12
    %80 = vst.msk [vmem:[%s79] ss:$16 sm:$0x3] %vm78, %v77
    %v81 = vld [vmem:[#allocation0] sm:$0x3]
    %82 = vrot.lane.b32.xlu0 %v81, 115
    %v83 = vpop.permute.xlu0 %82
    %vm84 = vcmask 7168
    %s85 = scalar_lea.vmem %s1, 13
    %86 = vst.msk [vmem:[%s85] ss:$16 sm:$0x3] %vm84, %v83
    %v87 = vld [vmem:[#allocation0] sm:$0x3]
    %88 = vrot.lane.b32.xlu0 %v87, 114
    %v89 = vpop.permute.xlu0 %88
    %vm90 = vcmask 7168
    %s91 = scalar_lea.vmem %s1, 14
    %92 = vst.msk [vmem:[%s91] ss:$16 sm:$0x3] %vm90, %v89
    %v93 = vld [vmem:[#allocation0] sm:$0x3]
    %94 = vrot.lane.b32.xlu0 %v93, 113
    %v95 = vpop.permute.xlu0 %94
    %vm96 = vcmask 7168
    %s97 = scalar_lea.vmem %s1, 15
    %98 = vst.msk [vmem:[%s97] ss:$16 sm:$0x3] %vm96, %v95

// kernel: pixel_attention_snn.1
$region0: #{pixel_attention_snn.1}
  #allocation0 [shape = 'u32[]', space=smem, size = 0x4, offset = 0x4, fixed_abs, tag = 'smem constant byte address 0x4 - core index']
  #allocation1 [shape = 'u32[144,128]{1,0:T(1,128)}', space=vmem, size = 0x12000, scoped, tag = 'internal scratch']
  #allocation2 [shape = 'f32[16,128]{1,0:T(8,128)}', space=vmem, size = 0x2000, scoped, tag = 'scratch operand']
  #allocation3 [shape = 'f32[16,128]{1,0:T(8,128)}', space=vmem, size = 0x2000, scoped, tag = 'scratch operand']
  %s0 = inlined_call_operand.vmem [shape: f32[4,32,128], index: 0, kind: input, shape index: {}]
  %s1 = inlined_call_operand.vmem [shape: f32[4,32,128], index: 1, kind: input, shape index: {}]
  %s2 = inlined_call_operand.vmem [shape: f32[7,32,1], index: 2, kind: input, shape index: {}]
  %s3 = inlined_call_operand.vmem [shape: f32[7,32,1], index: 3, kind: input, shape index: {}]
  %s4 = inlined_call_operand.vmem [shape: f32[32,1], index: 4, kind: input, shape index: {}]
  %s5 = inlined_call_operand.hbm [shape: f32[4,32,128], index: 5, kind: output, shape index: {}]
  %s6 = sld [smem:[#allocation0]]
  $region133: #{pixel_attention_snn.1} parent=0
    _
  %s8 = ssub.s32 1, %s6
  %s9 = scalar_select 0, %s8, %s6
  $region1: #{pixel_attention_snn.1} parent=0
    #allocation4 [shape = 'u8[114688]{0}', space=vmem, size = 0x1c000, scoped, tag = 'input window, operand 2']
    #allocation5 [shape = 'u8[114688]{0}', space=vmem, size = 0x1c000, scoped, tag = 'input window, operand 3']
    #allocation6 [shape = 'u8[16384]{0}', space=vmem, size = 0x4000, scoped, tag = 'output window, operand 0']
    #allocation7 [shape = 's32[2]{0}', space=sflag, size = 0x8, scoped, tag = 'scoped memory for pixel_attention_snn.1']
    %10 = vsyncpa [#allocation7], 0
    %s11 = scalar_lea.sflag [#allocation7], 1
    %12 = vsyncpa %s11, 0
    loop: start=0, step=1, limit=10
    $region2: #{pixel_attention_snn.1} parent=1 // loop_pre_header
      _
    $region3: #{pixel_attention_snn.1} parent=1 // loop_header
      %s14 = sphi 0, %s18
      %p15 = scmp.ge.s32.totalorder %s14, 10
      %s21 = sphi 0, %s33
      %s22 = sphi 0, %s29
      %s23 = sphi 0, %s21
      %s24 = sphi 0, %s22
      %s25 = sphi 0, %s23
      %s26 = sphi 0, %s24
      %s38 = sphi 0, %s40
      %s41 = sphi 0, %s38
      %s42 = sphi 0, %s41
      %s58 = sphi 0, %s42
      %s66 = sphi 0, %s68
      %s69 = sphi 0, %s66
      %s70 = sphi 0, %s69
      %s86 = sphi 0, %s70
      %s92 = sphi 0, %s94
      %s95 = sphi 0, %s92
      %s96 = sphi 0, %s95
      %s112 = sphi 0, %s96
      %s118 = sphi 0, %s120
      %s121 = sphi 0, %s118
      %s122 = sphi 0, %s121
      %s138 = sphi 0, %s122
      %s144 = sphi 0, %s146
      %s147 = sphi 0, %s144
      %s148 = sphi 0, %s147
      %s164 = sphi 0, %s148
      %s172 = sphi 0, %s174
      %s175 = sphi 0, %s172
      %s176 = sphi 0, %s175
      %s192 = sphi 0, %s176
    $region4: #{pixel_attention_snn.1} parent=1 // loop_header_branch
      %17 = sbr.rel (%p15) target = $region8
    $region5: #{pixel_attention_snn.1} parent=1 // loop_body
      %s19 = ssub.s32 %s14, 1
      %s20 = ssub.s32 %s14, 2
      %s27 = sadd.s32 1, %s22
      %p28 = scmp.ge.s32.totalorder %s27, 4
      %s29 = scalar_select %p28, 0, %s27
      %s30 = sadd.s32 1, %s21
      %s31 = scalar_select %p28, %s30, %s21
      %p32 = scmp.ge.s32.totalorder %s31, 2
      %s33 = scalar_select %p32, 0, %s31
      %s34 = ssub.s32 %s22, %s29
      %s35 = ssub.s32 %s21, %s33
      %s36 = sor.u32 %s34, %s35
      %p37 = scmp.eq.s32.totalorder %s36, 0
      %s39 = sadd.s32 %s38, 1
      %s40 = scalar_select %p37, %s38, %s39
      %p43 = pneg %p37
      %p44 = scmp.eq.s32.totalorder %s14, 7
      %p45 = por %p43, %p44
      %p46 = scmp.ne.s32.totalorder %s38, %s41
      %p47 = scmp.eq.s32.totalorder %s14, 0
      %p48 = por %p46, %p47
      %p49 = scmp.ne.s32.totalorder %s38, %s41
      %p50 = scmp.eq.s32.totalorder %s19, 7
      %p51 = por %p49, %p50
      %p52 = scmp.ne.s32.totalorder %s41, %s42
      %p53 = scmp.eq.s32.totalorder %s19, 0
      %p54 = por %p52, %p53
      %p55 = scmp.ne.s32.totalorder %s41, %s42
      %p56 = scmp.eq.s32.totalorder %s20, 7
      %p57 = por %p55, %p56
      %p59 = scmp.ne.s32.totalorder %s42, %s58
      %p60 = scmp.eq.s32.totalorder %s20, 0
      %p61 = por %p59, %p60
      %s62 = ssub.s32 %s22, %s29
      %s63 = ssub.s32 %s21, %s33
      %s64 = sor.u32 %s62, %s63
      %p65 = scmp.eq.s32.totalorder %s64, 0
      %s67 = sadd.s32 %s66, 1
      %s68 = scalar_select %p65, %s66, %s67
      %p71 = pneg %p65
      %p72 = scmp.eq.s32.totalorder %s14, 7
      %p73 = por %p71, %p72
      %p74 = scmp.ne.s32.totalorder %s66, %s69
      %p75 = scmp.eq.s32.totalorder %s14, 0
      %p76 = por %p74, %p75
      %p77 = scmp.ne.s32.totalorder %s66, %s69
      %p78 = scmp.eq.s32.totalorder %s19, 7
      %p79 = por %p77, %p78
      %p80 = scmp.ne.s32.totalorder %s69, %s70
      %p81 = scmp.eq.s32.totalorder %s19, 0
      %p82 = por %p80, %p81
      %p83 = scmp.ne.s32.totalorder %s69, %s70
      %p84 = scmp.eq.s32.totalorder %s20, 7
      %p85 = por %p83, %p84
      %p87 = scmp.ne.s32.totalorder %s70, %s86
      %p88 = scmp.eq.s32.totalorder %s20, 0
      %p89 = por %p87, %p88
      %s90 = ssub.s32 %s21, %s33
      %p91 = scmp.eq.s32.totalorder %s90, 0
      %s93 = sadd.s32 %s92, 1
      %s94 = scalar_select %p91, %s92, %s93
      %p97 = pneg %p91
      %p98 = scmp.eq.s32.totalorder %s14, 7
      %p99 = por %p97, %p98
      %p100 = scmp.ne.s32.totalorder %s92, %s95
      %p101 = scmp.eq.s32.totalorder %s14, 0
      %p102 = por %p100, %p101
      %p103 = scmp.ne.s32.totalorder %s92, %s95
      %p104 = scmp.eq.s32.totalorder %s19, 7
      %p105 = por %p103, %p104
      %p106 = scmp.ne.s32.totalorder %s95, %s96
      %p107 = scmp.eq.s32.totalorder %s19, 0
      %p108 = por %p106, %p107
      %p109 = scmp.ne.s32.totalorder %s95, %s96
      %p110 = scmp.eq.s32.totalorder %s20, 7
      %p111 = por %p109, %p110
      %p113 = scmp.ne.s32.totalorder %s96, %s112
      %p114 = scmp.eq.s32.totalorder %s20, 0
      %p115 = por %p113, %p114
      %s116 = ssub.s32 %s21, %s33
      %p117 = scmp.eq.s32.totalorder %s116, 0
      %s119 = sadd.s32 %s118, 1
      %s120 = scalar_select %p117, %s118, %s119
      %p123 = pneg %p117
      %p124 = scmp.eq.s32.totalorder %s14, 7
      %p125 = por %p123, %p124
      %p126 = scmp.ne.s32.totalorder %s118, %s121
      %p127 = scmp.eq.s32.totalorder %s14, 0
      %p128 = por %p126, %p127
      %p129 = scmp.ne.s32.totalorder %s118, %s121
      %p130 = scmp.eq.s32.totalorder %s19, 7
      %p131 = por %p129, %p130
      %p132 = scmp.ne.s32.totalorder %s121, %s122
      %p133 = scmp.eq.s32.totalorder %s19, 0
      %p134 = por %p132, %p133
      %p135 = scmp.ne.s32.totalorder %s121, %s122
      %p136 = scmp.eq.s32.totalorder %s20, 7
      %p137 = por %p135, %p136
      %p139 = scmp.ne.s32.totalorder %s122, %s138
      %p140 = scmp.eq.s32.totalorder %s20, 0
      %p141 = por %p139, %p140
      %s142 = ssub.s32 %s21, %s33
      %p143 = scmp.eq.s32.totalorder %s142, 0
      %s145 = sadd.s32 %s144, 1
      %s146 = scalar_select %p143, %s144, %s145
      %p149 = pneg %p143
      %p150 = scmp.eq.s32.totalorder %s14, 7
      %p151 = por %p149, %p150
      %p152 = scmp.ne.s32.totalorder %s144, %s147
      %p153 = scmp.eq.s32.totalorder %s14, 0
      %p154 = por %p152, %p153
      %p155 = scmp.ne.s32.totalorder %s144, %s147
      %p156 = scmp.eq.s32.totalorder %s19, 7
      %p157 = por %p155, %p156
      %p158 = scmp.ne.s32.totalorder %s147, %s148
      %p159 = scmp.eq.s32.totalorder %s19, 0
      %p160 = por %p158, %p159
      %p161 = scmp.ne.s32.totalorder %s147, %s148
      %p162 = scmp.eq.s32.totalorder %s20, 7
      %p163 = por %p161, %p162
      %p165 = scmp.ne.s32.totalorder %s148, %s164
      %p166 = scmp.eq.s32.totalorder %s20, 0
      %p167 = por %p165, %p166
      %s168 = ssub.s32 %s22, %s29
      %s169 = ssub.s32 %s21, %s33
      %s170 = sor.u32 %s168, %s169
      %p171 = scmp.eq.s32.totalorder %s170, 0
      %s173 = sadd.s32 %s172, 1
      %s174 = scalar_select %p171, %s172, %s173
      %p177 = pneg %p171
      %p178 = scmp.eq.s32.totalorder %s14, 7
      %p179 = por %p177, %p178
      %p180 = scmp.ne.s32.totalorder %s172, %s175
      %p181 = scmp.eq.s32.totalorder %s14, 0
      %p182 = por %p180, %p181
      %p183 = scmp.ne.s32.totalorder %s172, %s175
      %p184 = scmp.eq.s32.totalorder %s19, 7
      %p185 = por %p183, %p184
      %p186 = scmp.ne.s32.totalorder %s175, %s176
      %p187 = scmp.eq.s32.totalorder %s19, 0
      %p188 = por %p186, %p187
      %p189 = scmp.ne.s32.totalorder %s175, %s176
      %p190 = scmp.eq.s32.totalorder %s20, 7
      %p191 = por %p189, %p190
      %p193 = scmp.ne.s32.totalorder %s176, %s192
      %p194 = scmp.eq.s32.totalorder %s20, 0
      %p195 = por %p193, %p194
      %p196 = scmp.le.s32.totalorder 1, %s14
      %p197 = scmp.lt.s32.totalorder %s14, 9
      %p198 = pnand %p196, %p197
      %p199 = pneg %p198
      // Predicated region
      $region9: #{pixel_attention_snn.1} parent=5 // pred_check
        _
      $region10: #{pixel_attention_snn.1} parent=5 // pred_check_branch
        %201 = sbr.rel (%p198) target = $region12
      $region11: #{pixel_attention_snn.1} parent=5 // pred_region
        %s202 = ssub.s32 %s14, 1
      $region12: #{pixel_attention_snn.1} parent=5 // pred_fallthru
        _
      %p203 = scmp.lt.s32.totalorder %s14, 8
      // Predicated region
      $region13: #{pixel_attention_snn.1} parent=5 // pred_check
        %p204 = pneg %p203
      $region14: #{pixel_attention_snn.1} parent=5 // pred_check_branch
        %206 = sbr.rel (%p204) target = $region16
      $region15: #{pixel_attention_snn.1} parent=5 // pred_region
        // Predicated region
        $region17: #{pixel_attention_snn.1} parent=15 // pred_check
          %p207 = pneg %p48
        $region18: #{pixel_attention_snn.1} parent=15 // pred_check_branch
          %209 = sbr.rel (%p207) target = $region20
        $region19: #{pixel_attention_snn.1} parent=15 // pred_region
          %s210 = smul.u32 2, %s21
          %p211 = scmp.lt.s32.totalorder %s22, 3
          %s212 = scalar_select %p211, %s22, 3
          %p213 = scmp.lt.s32.totalorder %s210, 3
          %s214 = scalar_select %p213, %s210, 3
          %s215 = smul.addr %s212, 4
          %s216 = sadd.s32 %s214, %s215
          %s217 = smul.addr %s216, 8
          %s218 = scalar_lea.vmem %s0, %s217
          %s219 = smul.u32 2, %s21
        $region20: #{pixel_attention_snn.1} parent=15 // pred_fallthru
          _
        // Predicated region
        $region21: #{pixel_attention_snn.1} parent=15 // pred_check
          %p220 = pneg %p76
        $region22: #{pixel_attention_snn.1} parent=15 // pred_check_branch
          %222 = sbr.rel (%p220) target = $region24
        $region23: #{pixel_attention_snn.1} parent=15 // pred_region
          %s223 = smul.u32 2, %s21
          %p224 = scmp.lt.s32.totalorder %s22, 3
          %s225 = scalar_select %p224, %s22, 3
          %p226 = scmp.lt.s32.totalorder %s223, 3
          %s227 = scalar_select %p226, %s223, 3
          %s228 = smul.addr %s225, 4
          %s229 = sadd.s32 %s227, %s228
          %s230 = smul.addr %s229, 8
          %s231 = scalar_lea.vmem %s1, %s230
          %s232 = smul.u32 2, %s21
        $region24: #{pixel_attention_snn.1} parent=15 // pred_fallthru
          _
        // Predicated region
        $region25: #{pixel_attention_snn.1} parent=15 // pred_check
          %p233 = pneg %p102
        $region26: #{pixel_attention_snn.1} parent=15 // pred_check_branch
          %235 = sbr.rel (%p233) target = $region28
        $region27: #{pixel_attention_snn.1} parent=15 // pred_region
          %s236 = sand.u32 %s92, 1
          %s237 = sand.u32 %s92, 1
          %s238 = smul.addr %s237, 112
          %s239 = scalar_lea.vmem [#allocation4], %s238
          %s240 = smul.u32 2, %s21
          %s241 = smul.addr %s240, 8
          %s242 = scalar_lea.vmem %s2, %s241
          // Predicated region
          $region29: #{pixel_attention_snn.1} parent=27 // pred_check
            _
          $region30: #{pixel_attention_snn.1} parent=27 // pred_check_branch
            %244 = sbr.rel (0) target = $region32
          $region31: #{pixel_attention_snn.1} parent=27 // pred_region
            // Predicated region
            $region33: #{pixel_attention_snn.1} parent=31 // pred_check
              _
            $region34: #{pixel_attention_snn.1} parent=31 // pred_check_branch
              %246 = sbr.rel (0) target = $region36
            $region35: #{pixel_attention_snn.1} parent=31 // pred_region
              // Predicated region
              $region48: #{pixel_attention_snn.1} parent=35 // pred_check
                _
              $region49: #{pixel_attention_snn.1} parent=35 // pred_check_branch
                %287 = sbr.rel (0) target = $region51
              $region50: #{pixel_attention_snn.1} parent=35 // pred_region
                loop: start=0, step=1, limit=1
                $region52: #{pixel_attention_snn.1} parent=50 // loop_pre_header
                  _
                $region53: #{pixel_attention_snn.1} parent=50 // loop_header
                  %s289 = sphi 0, %s293
                  %p290 = scmp.ge.s32.totalorder %s289, 1
                  %s294 = sphi %s242, %s242
                  %s295 = sphi %s239, %s239
                $region54: #{pixel_attention_snn.1} parent=50 // loop_header_branch
                  %292 = sbr.rel (%p290) target = $region58
                $region55: #{pixel_attention_snn.1} parent=50 // loop_body
                  %v296 = vld [vmem:[%s294] sm:$0xff]
                  %297 = vst [vmem:[%s295] sm:$0xff] %v296
                  %v298 = vld [vmem:[%s294 + $0x8] sm:$0xff]
                  %299 = vst [vmem:[%s295 + $0x8] sm:$0xff] %v298
                  %v300 = vld [vmem:[%s294 + $0x20] sm:$0xff]
                  %301 = vst [vmem:[%s295 + $0x10] sm:$0xff] %v300
                  %v302 = vld [vmem:[%s294 + $0x28] sm:$0xff]
                  %303 = vst [vmem:[%s295 + $0x18] sm:$0xff] %v302
                  %v304 = vld [vmem:[%s294 + $0x40] sm:$0xff]
                  %305 = vst [vmem:[%s295 + $0x20] sm:$0xff] %v304
                  %v306 = vld [vmem:[%s294 + $0x48] sm:$0xff]
                  %307 = vst [vmem:[%s295 + $0x28] sm:$0xff] %v306
                  %v308 = vld [vmem:[%s294 + $0x60] sm:$0xff]
                  %309 = vst [vmem:[%s295 + $0x30] sm:$0xff] %v308
                  %v310 = vld [vmem:[%s294 + $0x68] sm:$0xff]
                  %311 = vst [vmem:[%s295 + $0x38] sm:$0xff] %v310
                  %v312 = vld [vmem:[%s294 + $0x80] sm:$0xff]
                  %313 = vst [vmem:[%s295 + $0x40] sm:$0xff] %v312
                  %v314 = vld [vmem:[%s294 + $0x88] sm:$0xff]
                  %315 = vst [vmem:[%s295 + $0x48] sm:$0xff] %v314
                  %v316 = vld [vmem:[%s294 + $0xa0] sm:$0xff]
                  %317 = vst [vmem:[%s295 + $0x50] sm:$0xff] %v316
                  %v318 = vld [vmem:[%s294 + $0xa8] sm:$0xff]
                  %319 = vst [vmem:[%s295 + $0x58] sm:$0xff] %v318
                  %v320 = vld [vmem:[%s294 + $0xc0] sm:$0xff]
                  %321 = vst [vmem:[%s295 + $0x60] sm:$0xff] %v320
                  %v322 = vld [vmem:[%s294 + $0xc8] sm:$0xff]
                  %323 = vst [vmem:[%s295 + $0x68] sm:$0xff] %v322
                $region56: #{pixel_attention_snn.1} parent=50 // loop_footer
                  %s293 = sadd.s32 1, %s289
                $region57: #{pixel_attention_snn.1} parent=50 // loop_footer_branch
                  %288 = sbr.rel target = $region53
                $region58: #{pixel_attention_snn.1} parent=50 // loop_exit
                  _
              $region51: #{pixel_attention_snn.1} parent=35 // pred_fallthru
                _
              // Predicated region
              $region59: #{pixel_attention_snn.1} parent=35 // pred_check
                _
              $region60: #{pixel_attention_snn.1} parent=35 // pred_check_branch
                %325 = sbr.rel target = $region62
              $region61: #{pixel_attention_snn.1} parent=35 // pred_region
                _
              $region62: #{pixel_attention_snn.1} parent=35 // pred_fallthru
                _
            $region36: #{pixel_attention_snn.1} parent=31 // pred_fallthru
              _
            // Predicated region
            $region37: #{pixel_attention_snn.1} parent=31 // pred_check
              _
            $region38: #{pixel_attention_snn.1} parent=31 // pred_check_branch
              %248 = sbr.rel target = $region40
            $region39: #{pixel_attention_snn.1} parent=31 // pred_region
              loop: start=0, step=1, limit=1
              $region41: #{pixel_attention_snn.1} parent=39 // loop_pre_header
                _
              $region42: #{pixel_attention_snn.1} parent=39 // loop_header
                %s251 = sphi 0, %s255
                %p252 = scmp.ge.s32.totalorder %s251, 1
                %s256 = sphi %s242, %s242
                %s257 = sphi %s239, %s239
              $region43: #{pixel_attention_snn.1} parent=39 // loop_header_branch
                %254 = sbr.rel (%p252) target = $region47
              $region44: #{pixel_attention_snn.1} parent=39 // loop_body
                %v258 = vld [vmem:[%s256] sm:$0xff]
                %259 = vst [vmem:[%s257] sm:$0xff] %v258
                %v260 = vld [vmem:[%s256 + $0x8] sm:$0xff]
                %261 = vst [vmem:[%s257 + $0x8] sm:$0xff] %v260
                %v262 = vld [vmem:[%s256 + $0x20] sm:$0xff]
                %263 = vst [vmem:[%s257 + $0x10] sm:$0xff] %v262
                %v264 = vld [vmem:[%s256 + $0x28] sm:$0xff]
                %265 = vst [vmem:[%s257 + $0x18] sm:$0xff] %v264
                %v266 = vld [vmem:[%s256 + $0x40] sm:$0xff]
                %267 = vst [vmem:[%s257 + $0x20] sm:$0xff] %v266
                %v268 = vld [vmem:[%s256 + $0x48] sm:$0xff]
                %269 = vst [vmem:[%s257 + $0x28] sm:$0xff] %v268
                %v270 = vld [vmem:[%s256 + $0x60] sm:$0xff]
                %271 = vst [vmem:[%s257 + $0x30] sm:$0xff] %v270
                %v272 = vld [vmem:[%s256 + $0x68] sm:$0xff]
                %273 = vst [vmem:[%s257 + $0x38] sm:$0xff] %v272
                %v274 = vld [vmem:[%s256 + $0x80] sm:$0xff]
                %275 = vst [vmem:[%s257 + $0x40] sm:$0xff] %v274
                %v276 = vld [vmem:[%s256 + $0x88] sm:$0xff]
                %277 = vst [vmem:[%s257 + $0x48] sm:$0xff] %v276
                %v278 = vld [vmem:[%s256 + $0xa0] sm:$0xff]
                %279 = vst [vmem:[%s257 + $0x50] sm:$0xff] %v278
                %v280 = vld [vmem:[%s256 + $0xa8] sm:$0xff]
                %281 = vst [vmem:[%s257 + $0x58] sm:$0xff] %v280
                %v282 = vld [vmem:[%s256 + $0xc0] sm:$0xff]
                %283 = vst [vmem:[%s257 + $0x60] sm:$0xff] %v282
                %v284 = vld [vmem:[%s256 + $0xc8] sm:$0xff]
                %285 = vst [vmem:[%s257 + $0x68] sm:$0xff] %v284
              $region45: #{pixel_attention_snn.1} parent=39 // loop_footer
                %s255 = sadd.s32 1, %s251
              $region46: #{pixel_attention_snn.1} parent=39 // loop_footer_branch
                %250 = sbr.rel target = $region42
              $region47: #{pixel_attention_snn.1} parent=39 // loop_exit
                _
            $region40: #{pixel_attention_snn.1} parent=31 // pred_fallthru
              _
          $region32: #{pixel_attention_snn.1} parent=27 // pred_fallthru
            _
          %326 = vnop
        $region28: #{pixel_attention_snn.1} parent=15 // pred_fallthru
          _
        // Predicated region
        $region63: #{pixel_attention_snn.1} parent=15 // pred_check
          %p327 = pneg %p128
        $region64: #{pixel_attention_snn.1} parent=15 // pred_check_branch
          %329 = sbr.rel (%p327) target = $region66
        $region65: #{pixel_attention_snn.1} parent=15 // pred_region
          %s330 = sand.u32 %s118, 1
          %s331 = sand.u32 %s118, 1
          %s332 = smul.addr %s331, 112
          %s333 = scalar_lea.vmem [#allocation5], %s332
          %s334 = smul.u32 2, %s21
          %s335 = smul.addr %s334, 8
          %s336 = scalar_lea.vmem %s3, %s335
          // Predicated region
          $region67: #{pixel_attention_snn.1} parent=65 // pred_check
            _
          $region68: #{pixel_attention_snn.1} parent=65 // pred_check_branch
            %338 = sbr.rel (0) target = $region70
          $region69: #{pixel_attention_snn.1} parent=65 // pred_region
            // Predicated region
            $region71: #{pixel_attention_snn.1} parent=69 // pred_check
              _
            $region72: #{pixel_attention_snn.1} parent=69 // pred_check_branch
              %340 = sbr.rel (0) target = $region74
            $region73: #{pixel_attention_snn.1} parent=69 // pred_region
              // Predicated region
              $region86: #{pixel_attention_snn.1} parent=73 // pred_check
                _
              $region87: #{pixel_attention_snn.1} parent=73 // pred_check_branch
                %381 = sbr.rel (0) target = $region89
              $region88: #{pixel_attention_snn.1} parent=73 // pred_region
                loop: start=0, step=1, limit=1
                $region90: #{pixel_attention_snn.1} parent=88 // loop_pre_header
                  _
                $region91: #{pixel_attention_snn.1} parent=88 // loop_header
                  %s383 = sphi 0, %s387
                  %p384 = scmp.ge.s32.totalorder %s383, 1
                  %s388 = sphi %s336, %s336
                  %s389 = sphi %s333, %s333
                $region92: #{pixel_attention_snn.1} parent=88 // loop_header_branch
                  %386 = sbr.rel (%p384) target = $region96
                $region93: #{pixel_attention_snn.1} parent=88 // loop_body
                  %v390 = vld [vmem:[%s388] sm:$0xff]
                  %391 = vst [vmem:[%s389] sm:$0xff] %v390
                  %v392 = vld [vmem:[%s388 + $0x8] sm:$0xff]
                  %393 = vst [vmem:[%s389 + $0x8] sm:$0xff] %v392
                  %v394 = vld [vmem:[%s388 + $0x20] sm:$0xff]
                  %395 = vst [vmem:[%s389 + $0x10] sm:$0xff] %v394
                  %v396 = vld [vmem:[%s388 + $0x28] sm:$0xff]
                  %397 = vst [vmem:[%s389 + $0x18] sm:$0xff] %v396
                  %v398 = vld [vmem:[%s388 + $0x40] sm:$0xff]
                  %399 = vst [vmem:[%s389 + $0x20] sm:$0xff] %v398
                  %v400 = vld [vmem:[%s388 + $0x48] sm:$0xff]
                  %401 = vst [vmem:[%s389 + $0x28] sm:$0xff] %v400
                  %v402 = vld [vmem:[%s388 + $0x60] sm:$0xff]
                  %403 = vst [vmem:[%s389 + $0x30] sm:$0xff] %v402
                  %v404 = vld [vmem:[%s388 + $0x68] sm:$0xff]
                  %405 = vst [vmem:[%s389 + $0x38] sm:$0xff] %v404
                  %v406 = vld [vmem:[%s388 + $0x80] sm:$0xff]
                  %407 = vst [vmem:[%s389 + $0x40] sm:$0xff] %v406
                  %v408 = vld [vmem:[%s388 + $0x88] sm:$0xff]
                  %409 = vst [vmem:[%s389 + $0x48] sm:$0xff] %v408
                  %v410 = vld [vmem:[%s388 + $0xa0] sm:$0xff]
                  %411 = vst [vmem:[%s389 + $0x50] sm:$0xff] %v410
                  %v412 = vld [vmem:[%s388 + $0xa8] sm:$0xff]
                  %413 = vst [vmem:[%s389 + $0x58] sm:$0xff] %v412
                  %v414 = vld [vmem:[%s388 + $0xc0] sm:$0xff]
                  %415 = vst [vmem:[%s389 + $0x60] sm:$0xff] %v414
                  %v416 = vld [vmem:[%s388 + $0xc8] sm:$0xff]
                  %417 = vst [vmem:[%s389 + $0x68] sm:$0xff] %v416
                $region94: #{pixel_attention_snn.1} parent=88 // loop_footer
                  %s387 = sadd.s32 1, %s383
                $region95: #{pixel_attention_snn.1} parent=88 // loop_footer_branch
                  %382 = sbr.rel target = $region91
                $region96: #{pixel_attention_snn.1} parent=88 // loop_exit
                  _
              $region89: #{pixel_attention_snn.1} parent=73 // pred_fallthru
                _
              // Predicated region
              $region97: #{pixel_attention_snn.1} parent=73 // pred_check
                _
              $region98: #{pixel_attention_snn.1} parent=73 // pred_check_branch
                %419 = sbr.rel target = $region100
              $region99: #{pixel_attention_snn.1} parent=73 // pred_region
                _
              $region100: #{pixel_attention_snn.1} parent=73 // pred_fallthru
                _
            $region74: #{pixel_attention_snn.1} parent=69 // pred_fallthru
              _
            // Predicated region
            $region75: #{pixel_attention_snn.1} parent=69 // pred_check
              _
            $region76: #{pixel_attention_snn.1} parent=69 // pred_check_branch
              %342 = sbr.rel target = $region78
            $region77: #{pixel_attention_snn.1} parent=69 // pred_region
              loop: start=0, step=1, limit=1
              $region79: #{pixel_attention_snn.1} parent=77 // loop_pre_header
                _
              $region80: #{pixel_attention_snn.1} parent=77 // loop_header
                %s345 = sphi 0, %s349
                %p346 = scmp.ge.s32.totalorder %s345, 1
                %s350 = sphi %s336, %s336
                %s351 = sphi %s333, %s333
              $region81: #{pixel_attention_snn.1} parent=77 // loop_header_branch
                %348 = sbr.rel (%p346) target = $region85
              $region82: #{pixel_attention_snn.1} parent=77 // loop_body
                %v352 = vld [vmem:[%s350] sm:$0xff]
                %353 = vst [vmem:[%s351] sm:$0xff] %v352
                %v354 = vld [vmem:[%s350 + $0x8] sm:$0xff]
                %355 = vst [vmem:[%s351 + $0x8] sm:$0xff] %v354
                %v356 = vld [vmem:[%s350 + $0x20] sm:$0xff]
                %357 = vst [vmem:[%s351 + $0x10] sm:$0xff] %v356
                %v358 = vld [vmem:[%s350 + $0x28] sm:$0xff]
                %359 = vst [vmem:[%s351 + $0x18] sm:$0xff] %v358
                %v360 = vld [vmem:[%s350 + $0x40] sm:$0xff]
                %361 = vst [vmem:[%s351 + $0x20] sm:$0xff] %v360
                %v362 = vld [vmem:[%s350 + $0x48] sm:$0xff]
                %363 = vst [vmem:[%s351 + $0x28] sm:$0xff] %v362
                %v364 = vld [vmem:[%s350 + $0x60] sm:$0xff]
                %365 = vst [vmem:[%s351 + $0x30] sm:$0xff] %v364
                %v366 = vld [vmem:[%s350 + $0x68] sm:$0xff]
                %367 = vst [vmem:[%s351 + $0x38] sm:$0xff] %v366
                %v368 = vld [vmem:[%s350 + $0x80] sm:$0xff]
                %369 = vst [vmem:[%s351 + $0x40] sm:$0xff] %v368
                %v370 = vld [vmem:[%s350 + $0x88] sm:$0xff]
                %371 = vst [vmem:[%s351 + $0x48] sm:$0xff] %v370
                %v372 = vld [vmem:[%s350 + $0xa0] sm:$0xff]
                %373 = vst [vmem:[%s351 + $0x50] sm:$0xff] %v372
                %v374 = vld [vmem:[%s350 + $0xa8] sm:$0xff]
                %375 = vst [vmem:[%s351 + $0x58] sm:$0xff] %v374
                %v376 = vld [vmem:[%s350 + $0xc0] sm:$0xff]
                %377 = vst [vmem:[%s351 + $0x60] sm:$0xff] %v376
                %v378 = vld [vmem:[%s350 + $0xc8] sm:$0xff]
                %379 = vst [vmem:[%s351 + $0x68] sm:$0xff] %v378
              $region83: #{pixel_attention_snn.1} parent=77 // loop_footer
                %s349 = sadd.s32 1, %s345
              $region84: #{pixel_attention_snn.1} parent=77 // loop_footer_branch
                %344 = sbr.rel target = $region80
              $region85: #{pixel_attention_snn.1} parent=77 // loop_exit
                _
            $region78: #{pixel_attention_snn.1} parent=69 // pred_fallthru
              _
          $region70: #{pixel_attention_snn.1} parent=65 // pred_fallthru
            _
          %420 = vnop
        $region66: #{pixel_attention_snn.1} parent=15 // pred_fallthru
          _
        // Predicated region
        $region101: #{pixel_attention_snn.1} parent=15 // pred_check
          %p421 = pneg %p154
        $region102: #{pixel_attention_snn.1} parent=15 // pred_check_branch
          %423 = sbr.rel (%p421) target = $region104
        $region103: #{pixel_attention_snn.1} parent=15 // pred_region
          %s424 = smul.u32 2, %s21
          %p425 = scmp.lt.s32.totalorder %s424, 3
          %s426 = scalar_select %p425, %s424, 3
          %s427 = smul.addr %s426, 8
          %s428 = scalar_lea.vmem %s4, %s427
          %s429 = smul.u32 2, %s21
        $region104: #{pixel_attention_snn.1} parent=15 // pred_fallthru
          _
      $region16: #{pixel_attention_snn.1} parent=5 // pred_fallthru
        _
      %p430 = scmp.le.s32.totalorder 1, %s14
      %p431 = scmp.lt.s32.totalorder %s14, 9
      %p432 = pnand %p430, %p431
      %p433 = pneg %p432
      // Predicated region
      $region105: #{pixel_attention_snn.1} parent=5 // pred_check
        _
      $region106: #{pixel_attention_snn.1} parent=5 // pred_check_branch
        %435 = sbr.rel (%p432) target = $region108
      $region107: #{pixel_attention_snn.1} parent=5 // pred_region
        %s436 = ssub.s32 %s14, 1
        %s437 = sand.u32 %s95, 1
        %s438 = sand.u32 %s95, 1
        %s439 = smul.addr %s438, 112
        %s440 = scalar_lea.vmem [#allocation4], %s439
        // Predicated region
        $region109: #{pixel_attention_snn.1} parent=107 // pred_check
          %p441 = pneg %p108
        $region110: #{pixel_attention_snn.1} parent=107 // pred_check_branch
          %443 = sbr.rel (%p441) target = $region112
        $region111: #{pixel_attention_snn.1} parent=107 // pred_region
          _
        $region112: #{pixel_attention_snn.1} parent=107 // pred_fallthru
          _
        %s444 = sand.u32 %s121, 1
        %s445 = sand.u32 %s121, 1
        %s446 = smul.addr %s445, 112
        %s447 = scalar_lea.vmem [#allocation5], %s446
        // Predicated region
        $region113: #{pixel_attention_snn.1} parent=107 // pred_check
          %p448 = pneg %p134
        $region114: #{pixel_attention_snn.1} parent=107 // pred_check_branch
          %450 = sbr.rel (%p448) target = $region116
        $region115: #{pixel_attention_snn.1} parent=107 // pred_region
          _
        $region116: #{pixel_attention_snn.1} parent=107 // pred_fallthru
          _
        %s451 = smul.u32 2, %s23
        %p452 = scmp.lt.s32.totalorder %s24, 3
        %s453 = scalar_select %p452, %s24, 3
        %p454 = scmp.lt.s32.totalorder %s451, 3
        %s455 = scalar_select %p454, %s451, 3
        %s456 = smul.addr %s453, 4
        %s457 = sadd.s32 %s455, %s456
        %s458 = smul.addr %s457, 8
        %s459 = scalar_lea.vmem %s0, %s458
        %p460 = pneg %p54
        %p461 = pneg %p51
        %s462 = smul.u32 2, %s23
        %p463 = scmp.lt.s32.totalorder %s24, 3
        %s464 = scalar_select %p463, %s24, 3
        %p465 = scmp.lt.s32.totalorder %s462, 3
        %s466 = scalar_select %p465, %s462, 3
        %s467 = smul.addr %s464, 4
        %s468 = sadd.s32 %s466, %s467
        %s469 = smul.addr %s468, 8
        %s470 = scalar_lea.vmem %s1, %s469
        %p471 = pneg %p82
        %p472 = pneg %p79
        %s473 = sand.u32 %s95, 1
        %s474 = sand.u32 %s95, 1
        %s475 = smul.addr %s474, 112
        %s476 = scalar_lea.vmem [#allocation4], %s475
        %p477 = pneg %p108
        %p478 = pneg %p105
        %s479 = sand.u32 %s121, 1
        %s480 = sand.u32 %s121, 1
        %s481 = smul.addr %s480, 112
        %s482 = scalar_lea.vmem [#allocation5], %s481
        %p483 = pneg %p134
        %p484 = pneg %p131
        %s485 = smul.u32 2, %s23
        %p486 = scmp.lt.s32.totalorder %s485, 3
        %s487 = scalar_select %p486, %s485, 3
        %s488 = smul.addr %s487, 8
        %s489 = scalar_lea.vmem %s4, %s488
        %p490 = pneg %p160
        %p491 = pneg %p157
        %p492 = pneg %p188
        %p493 = pneg %p185
        %s494 = sand.u32 %s175, 1
        %s495 = scalar_lea.sflag [#allocation7], %s494
        %s496 = sand.u32 %s175, 1
        %s497 = smul.addr %s496, 16
        %s498 = scalar_lea.vmem [#allocation6], %s497
        %s499 = smul.u32 2, %s23
        %p500 = scmp.lt.s32.totalorder %s24, 3
        %s501 = scalar_select %p500, %s24, 3
        %p502 = scmp.lt.s32.totalorder %s499, 3
        %s503 = scalar_select %p502, %s499, 3
        %s504 = smul.addr %s501, 4
        %s505 = sadd.s32 %s503, %s504
        %s506 = smul.addr %s505, 8
        %s507 = scalar_lea.vmem %s0, %s506
        %s508 = smul.u32 2, %s23
        %s509 = smul.u32 2, %s23
        %p510 = scmp.lt.s32.totalorder %s24, 3
        %s511 = scalar_select %p510, %s24, 3
        %p512 = scmp.lt.s32.totalorder %s509, 3
        %s513 = scalar_select %p512, %s509, 3
        %s514 = smul.addr %s511, 4
        %s515 = sadd.s32 %s513, %s514
        %s516 = smul.addr %s515, 8
        %s517 = scalar_lea.vmem %s1, %s516
        %s518 = smul.u32 2, %s23
        %s519 = smul.u32 2, %s23
        %s520 = smul.u32 2, %s23
        %s521 = smul.u32 2, %s23
        %p522 = scmp.lt.s32.totalorder %s521, 3
        %s523 = scalar_select %p522, %s521, 3
        %s524 = smul.addr %s523, 8
        %s525 = scalar_lea.vmem %s4, %s524
        %s526 = smul.u32 2, %s23
        %s527 = smul.u32 2, %s23
        %p528 = scmp.eq.s32.totalorder %s24, 0
        // Predicated region
        $region117: #{pixel_attention_snn.1} parent=107 // pred_check
          %p529 = pneg %p528
        $region118: #{pixel_attention_snn.1} parent=107 // pred_check_branch
          %531 = sbr.rel (%p529) target = $region120
        $region119: #{pixel_attention_snn.1} parent=107 // pred_region
          %532 = vst [vmem:[#allocation2] sm:$0xff] 0.0
          %533 = vst [vmem:[#allocation2 + $0x8] sm:$0xff] 0.0
          %534 = vst [vmem:[#allocation3] sm:$0xff] 0.0
          %535 = vst [vmem:[#allocation3 + $0x8] sm:$0xff] 0.0
        $region120: #{pixel_attention_snn.1} parent=107 // pred_fallthru
          _
        %v536 = vld [vmem:[%s507] sm:$0xff]
        %v537 = vld [vmem:[%s507 + $0x8] sm:$0xff]
        %v538 = vld [vmem:[#allocation2] sm:$0xff]
        %v539 = vld [vmem:[#allocation2 + $0x8] sm:$0xff]
        %v540 = vsub.f32 %v536, %v538
        %v541 = vsub.f32 %v537, %v539
        %v542 = vmul.f32 %v540, 0.5
        %v543 = vmul.f32 %v541, 0.5
        %v544 = vadd.f32 %v538, %v542
        %v545 = vadd.f32 %v539, %v543
        %vm546 = vcmp.ge.f32.partialorder %v544, 1.0
        %vm547 = vcmp.ge.f32.partialorder %v545, 1.0
        %v548 = vsel %vm546, 1, 0
        %v549 = vsel %vm547, 1, 0
        %v550 = vcvt.s32.f32 %v548
        %v551 = vcvt.s32.f32 %v549
        %vm552 = vcmp.gt.f32.partialorder %v550, 0.0
        %vm553 = vcmp.gt.f32.partialorder %v551, 0.0
        %v554 = vsel %vm552, 0.0, %v544
        %v555 = vsel %vm553, 0.0, %v545
        %556 = vst [vmem:[#allocation2] sm:$0xff] %v554
        %557 = vst [vmem:[#allocation2 + $0x8] sm:$0xff] %v555
        %v558 = vld [vmem:[%s517] sm:$0xff]
        %v559 = vld [vmem:[%s517 + $0x8] sm:$0xff]
        %v560 = vld [vmem:[#allocation3] sm:$0xff]
        %v561 = vld [vmem:[#allocation3 + $0x8] sm:$0xff]
        %v562 = vsub.f32 %v558, %v560
        %v563 = vsub.f32 %v559, %v561
        %v564 = vmul.f32 %v562, 0.5
        %v565 = vmul.f32 %v563, 0.5
        %v566 = vadd.f32 %v560, %v564
        %v567 = vadd.f32 %v561, %v565
        %vm568 = vcmp.ge.f32.partialorder %v566, 1.0
        %vm569 = vcmp.ge.f32.partialorder %v567, 1.0
        %v570 = vsel %vm568, 1, 0
        %v571 = vsel %vm569, 1, 0
        %v572 = vcvt.s32.f32 %v570
        %v573 = vcvt.s32.f32 %v571
        %vm574 = vcmp.gt.f32.partialorder %v572, 0.0
        %vm575 = vcmp.gt.f32.partialorder %v573, 0.0
        %v576 = vsel %vm574, 0.0, %v566
        %v577 = vsel %vm575, 0.0, %v567
        %578 = vst [vmem:[#allocation3] sm:$0xff] %v576
        %579 = vst [vmem:[#allocation3 + $0x8] sm:$0xff] %v577
        %582 = vrot.lane.b32.xlu0 %v550, 125
        %v583 = vpop.permute.xlu0 %582
        %584 = vrot.lane.b32.xlu0 %v551, 125
        %v585 = vpop.permute.xlu0 %584
        %588 = vrot.lane.b32.xlu0 %v550, 127
        %v589 = vpop.permute.xlu0 %588
        %590 = vrot.lane.b32.xlu0 %v551, 127
        %v591 = vpop.permute.xlu0 %590
        %594 = vrot.lane.b32.xlu0 %v550, 1
        %v595 = vpop.permute.xlu0 %594
        %596 = vrot.lane.b32.xlu0 %v551, 1
        %v597 = vpop.permute.xlu0 %596
        %600 = vrot.lane.b32.xlu0 %v550, 3
        %v601 = vpop.permute.xlu0 %600
        %602 = vrot.lane.b32.xlu0 %v551, 3
        %v603 = vpop.permute.xlu0 %602
        %606 = vrot.lane.b32.xlu0 %v550, 5
        %v607 = vpop.permute.xlu0 %606
        %608 = vrot.lane.b32.xlu0 %v551, 5
        %v609 = vpop.permute.xlu0 %608
        %612 = vrot.lane.b32.xlu0 %v550, 7
        %v613 = vpop.permute.xlu0 %612
        %614 = vrot.lane.b32.xlu0 %v551, 7
        %v615 = vpop.permute.xlu0 %614
        %618 = vrot.lane.b32.xlu0 %v550, 9
        %v619 = vpop.permute.xlu0 %618
        %620 = vrot.lane.b32.xlu0 %v551, 9
        %v621 = vpop.permute.xlu0 %620
        %vm624 = vcmask 7168
        %v625 = vsel %vm624, %v583, %v589
        %v626 = vsel %vm624, %v585, %v591
        %vm627 = vcmask 15360
        %v628 = vsel %vm627, %v625, %v595
        %v629 = vsel %vm627, %v626, %v597
        %vm630 = vcmask 23552
        %v631 = vsel %vm630, %v628, %v601
        %v632 = vsel %vm630, %v629, %v603
        %v633 = vsel %vm630, %v601, %v607
        %v634 = vsel %vm630, %v603, %v609
        %vm635 = vcmask 31744
        %v636 = vsel %vm635, %v633, %v613
        %v637 = vsel %vm635, %v634, %v615
        %vm638 = vcmask 39936
        %v639 = vsel %vm638, %v636, %v619
        %v640 = vsel %vm638, %v637, %v621
        %643 = vrot.lane.b32.xlu0 %v572, 125
        %v644 = vpop.permute.xlu0 %643
        %645 = vrot.lane.b32.xlu0 %v573, 125
        %v646 = vpop.permute.xlu0 %645
        %649 = vrot.lane.b32.xlu0 %v572, 127
        %v650 = vpop.permute.xlu0 %649
        %651 = vrot.lane.b32.xlu0 %v573, 127
        %v652 = vpop.permute.xlu0 %651
        %655 = vrot.lane.b32.xlu0 %v572, 1
        %v656 = vpop.permute.xlu0 %655
        %657 = vrot.lane.b32.xlu0 %v573, 1
        %v658 = vpop.permute.xlu0 %657
        %661 = vrot.lane.b32.xlu0 %v572, 3
        %v662 = vpop.permute.xlu0 %661
        %663 = vrot.lane.b32.xlu0 %v573, 3
        %v664 = vpop.permute.xlu0 %663
        %667 = vrot.lane.b32.xlu0 %v572, 5
        %v668 = vpop.permute.xlu0 %667
        %669 = vrot.lane.b32.xlu0 %v573, 5
        %v670 = vpop.permute.xlu0 %669
        %673 = vrot.lane.b32.xlu0 %v572, 7
        %v674 = vpop.permute.xlu0 %673
        %675 = vrot.lane.b32.xlu0 %v573, 7
        %v676 = vpop.permute.xlu0 %675
        %679 = vrot.lane.b32.xlu0 %v572, 9
        %v680 = vpop.permute.xlu0 %679
        %681 = vrot.lane.b32.xlu0 %v573, 9
        %v682 = vpop.permute.xlu0 %681
        %v685 = vsel %vm624, %v644, %v650
        %v686 = vsel %vm624, %v646, %v652
        %v687 = vsel %vm627, %v685, %v656
        %v688 = vsel %vm627, %v686, %v658
        %v689 = vsel %vm630, %v687, %v662
        %v690 = vsel %vm630, %v688, %v664
        %v691 = vsel %vm630, %v662, %v668
        %v692 = vsel %vm630, %v664, %v670
        %v693 = vsel %vm635, %v691, %v674
        %v694 = vsel %vm635, %v692, %v676
        %v695 = vsel %vm638, %v693, %v680
        %v696 = vsel %vm638, %v694, %v682
        %v697 = vld [vmem:[%s440] sm:$0xff]
        %v698 = vld [vmem:[%s440 + $0x8] sm:$0xff]
        %700 = vset.pattern.permute.xlu0 0
        %701 = vperm.xlu0 %700, %v697
        %v702 = vpop.permute.xlu0 %701
        %705 = vset.pattern.permute.xlu0 0
        %706 = vperm.xlu0 %705, %v698
        %v707 = vpop.permute.xlu0 %706
        %v709 = vmul.f32 %v702, %v631
        %v710 = vmul.f32 %v707, %v632
        %v711 = vld [vmem:[%s447] sm:$0xff]
        %v712 = vld [vmem:[%s447 + $0x8] sm:$0xff]
        %714 = vset.pattern.permute.xlu0 0
        %715 = vperm.xlu0 %714, %v711
        %v716 = vpop.permute.xlu0 %715
        %719 = vset.pattern.permute.xlu0 0
        %720 = vperm.xlu0 %719, %v712
        %v721 = vpop.permute.xlu0 %720
        %v723 = vmul.f32 %v716, %v689
        %v724 = vmul.f32 %v721, %v690
        %v725 = vadd.f32 %v709, %v723
        %v726 = vadd.f32 %v710, %v724
        %s727 = scalar_lea.vmem %s440, 16 [#allocation4]
        %v728 = vld [vmem:[%s727] sm:$0xff]
        %v729 = vld [vmem:[%s727 + $0x8] sm:$0xff]
        %731 = vset.pattern.permute.xlu0 0
        %732 = vperm.xlu0 %731, %v728
        %v733 = vpop.permute.xlu0 %732
        %736 = vset.pattern.permute.xlu0 0
        %737 = vperm.xlu0 %736, %v729
        %v738 = vpop.permute.xlu0 %737
        %v740 = vmul.f32 %v733, %v631
        %v741 = vmul.f32 %v733, %v639
        %v742 = vmul.f32 %v738, %v632
        %v743 = vmul.f32 %v738, %v640
        %748 = vrot.lane.b32.xlu0 %v740, 127
        %v749 = vpop.permute.xlu0 %748
        %750 = vrot.lane.b32.xlu0 %v741, 127
        %v751 = vpop.permute.xlu0 %750
        %752 = vrot.lane.b32.xlu0 %v742, 127
        %v753 = vpop.permute.xlu0 %752
        %754 = vrot.lane.b32.xlu0 %v743, 127
        %v755 = vpop.permute.xlu0 %754
        %vm756 = vcmask 1039360
        %v757 = vsel %vm756, %v749, %v751
        %v758 = vsel %vm756, %v753, %v755
        %v761 = vadd.f32 %v725, %v757
        %v762 = vadd.f32 %v726, %v758
        %s763 = scalar_lea.vmem %s447, 16 [#allocation5]
        %v764 = vld [vmem:[%s763] sm:$0xff]
        %v765 = vld [vmem:[%s763 + $0x8] sm:$0xff]
        %767 = vset.pattern.permute.xlu0 0
        %768 = vperm.xlu0 %767, %v764
        %v769 = vpop.permute.xlu0 %768
        %772 = vset.pattern.permute.xlu0 0
        %773 = vperm.xlu0 %772, %v765
        %v774 = vpop.permute.xlu0 %773
        %v776 = vmul.f32 %v769, %v689
        %v777 = vmul.f32 %v769, %v695
        %v778 = vmul.f32 %v774, %v690
        %v779 = vmul.f32 %v774, %v696
        %784 = vrot.lane.b32.xlu0 %v776, 127
        %v785 = vpop.permute.xlu0 %784
        %786 = vrot.lane.b32.xlu0 %v777, 127
        %v787 = vpop.permute.xlu0 %786
        %788 = vrot.lane.b32.xlu0 %v778, 127
        %v789 = vpop.permute.xlu0 %788
        %790 = vrot.lane.b32.xlu0 %v779, 127
        %v791 = vpop.permute.xlu0 %790
        %v792 = vsel %vm756, %v785, %v787
        %v793 = vsel %vm756, %v789, %v791
        %v796 = vadd.f32 %v761, %v792
        %v797 = vadd.f32 %v762, %v793
        %s798 = scalar_lea.vmem %s440, 32 [#allocation4]
        %v799 = vld [vmem:[%s798] sm:$0xff]
        %v800 = vld [vmem:[%s798 + $0x8] sm:$0xff]
        %802 = vset.pattern.permute.xlu0 0
        %803 = vperm.xlu0 %802, %v799
        %v804 = vpop.permute.xlu0 %803
        %807 = vset.pattern.permute.xlu0 0
        %808 = vperm.xlu0 %807, %v800
        %v809 = vpop.permute.xlu0 %808
        %v811 = vmul.f32 %v804, %v631
        %v812 = vmul.f32 %v804, %v639
        %v813 = vmul.f32 %v809, %v632
        %v814 = vmul.f32 %v809, %v640
        %819 = vrot.lane.b32.xlu0 %v811, 126
        %v820 = vpop.permute.xlu0 %819
        %821 = vrot.lane.b32.xlu0 %v812, 126
        %v822 = vpop.permute.xlu0 %821
        %823 = vrot.lane.b32.xlu0 %v813, 126
        %v824 = vpop.permute.xlu0 %823
        %825 = vrot.lane.b32.xlu0 %v814, 126
        %v826 = vpop.permute.xlu0 %825
        %vm827 = vcmask 1031168
        %v828 = vsel %vm827, %v820, %v822
        %v829 = vsel %vm827, %v824, %v826
        %v832 = vadd.f32 %v796, %v828
        %v833 = vadd.f32 %v797, %v829
        %s834 = scalar_lea.vmem %s447, 32 [#allocation5]
        %v835 = vld [vmem:[%s834] sm:$0xff]
        %v836 = vld [vmem:[%s834 + $0x8] sm:$0xff]
        %838 = vset.pattern.permute.xlu0 0
        %839 = vperm.xlu0 %838, %v835
        %v840 = vpop.permute.xlu0 %839
        %843 = vset.pattern.permute.xlu0 0
        %844 = vperm.xlu0 %843, %v836
        %v845 = vpop.permute.xlu0 %844
        %v847 = vmul.f32 %v840, %v689
        %v848 = vmul.f32 %v840, %v695
        %v849 = vmul.f32 %v845, %v690
        %v850 = vmul.f32 %v845, %v696
        %855 = vrot.lane.b32.xlu0 %v847, 126
        %v856 = vpop.permute.xlu0 %855
        %857 = vrot.lane.b32.xlu0 %v848, 126
        %v858 = vpop.permute.xlu0 %857
        %859 = vrot.lane.b32.xlu0 %v849, 126
        %v860 = vpop.permute.xlu0 %859
        %861 = vrot.lane.b32.xlu0 %v850, 126
        %v862 = vpop.permute.xlu0 %861
        %v863 = vsel %vm827, %v856, %v858
        %v864 = vsel %vm827, %v860, %v862
        %v867 = vadd.f32 %v832, %v863
        %v868 = vadd.f32 %v833, %v864
        %s869 = scalar_lea.vmem %s440, 48 [#allocation4]
        %v870 = vld [vmem:[%s869] sm:$0xff]
        %v871 = vld [vmem:[%s869 + $0x8] sm:$0xff]
        %873 = vset.pattern.permute.xlu0 0
        %874 = vperm.xlu0 %873, %v870
        %v875 = vpop.permute.xlu0 %874
        %878 = vset.pattern.permute.xlu0 0
        %879 = vperm.xlu0 %878, %v871
        %v880 = vpop.permute.xlu0 %879
        %v882 = vmul.f32 %v875, %v631
        %v883 = vmul.f32 %v875, %v639
        %v884 = vmul.f32 %v880, %v632
        %v885 = vmul.f32 %v880, %v640
        %890 = vrot.lane.b32.xlu0 %v882, 125
        %v891 = vpop.permute.xlu0 %890
        %892 = vrot.lane.b32.xlu0 %v883, 125
        %v893 = vpop.permute.xlu0 %892
        %894 = vrot.lane.b32.xlu0 %v884, 125
        %v895 = vpop.permute.xlu0 %894
        %896 = vrot.lane.b32.xlu0 %v885, 125
        %v897 = vpop.permute.xlu0 %896
        %vm898 = vcmask 1022976
        %v899 = vsel %vm898, %v891, %v893
        %v900 = vsel %vm898, %v895, %v897
        %v903 = vadd.f32 %v867, %v899
        %v904 = vadd.f32 %v868, %v900
        %s905 = scalar_lea.vmem %s447, 48 [#allocation5]
        %v906 = vld [vmem:[%s905] sm:$0xff]
        %v907 = vld [vmem:[%s905 + $0x8] sm:$0xff]
        %909 = vset.pattern.permute.xlu0 0
        %910 = vperm.xlu0 %909, %v906
        %v911 = vpop.permute.xlu0 %910
        %914 = vset.pattern.permute.xlu0 0
        %915 = vperm.xlu0 %914, %v907
        %v916 = vpop.permute.xlu0 %915
        %v918 = vmul.f32 %v911, %v689
        %v919 = vmul.f32 %v911, %v695
        %v920 = vmul.f32 %v916, %v690
        %v921 = vmul.f32 %v916, %v696
        %926 = vrot.lane.b32.xlu0 %v918, 125
        %v927 = vpop.permute.xlu0 %926
        %928 = vrot.lane.b32.xlu0 %v919, 125
        %v929 = vpop.permute.xlu0 %928
        %930 = vrot.lane.b32.xlu0 %v920, 125
        %v931 = vpop.permute.xlu0 %930
        %932 = vrot.lane.b32.xlu0 %v921, 125
        %v933 = vpop.permute.xlu0 %932
        %v934 = vsel %vm898, %v927, %v929
        %v935 = vsel %vm898, %v931, %v933
        %v938 = vadd.f32 %v903, %v934
        %v939 = vadd.f32 %v904, %v935
        %s940 = scalar_lea.vmem %s440, 64 [#allocation4]
        %v941 = vld [vmem:[%s940] sm:$0xff]
        %v942 = vld [vmem:[%s940 + $0x8] sm:$0xff]
        %944 = vset.pattern.permute.xlu0 0
        %945 = vperm.xlu0 %944, %v941
        %v946 = vpop.permute.xlu0 %945
        %949 = vset.pattern.permute.xlu0 0
        %950 = vperm.xlu0 %949, %v942
        %v951 = vpop.permute.xlu0 %950
        %v953 = vmul.f32 %v946, %v631
        %v954 = vmul.f32 %v946, %v639
        %v955 = vmul.f32 %v951, %v632
        %v956 = vmul.f32 %v951, %v640
        %961 = vrot.lane.b32.xlu0 %v953, 124
        %v962 = vpop.permute.xlu0 %961
        %963 = vrot.lane.b32.xlu0 %v954, 124
        %v964 = vpop.permute.xlu0 %963
        %965 = vrot.lane.b32.xlu0 %v955, 124
        %v966 = vpop.permute.xlu0 %965
        %967 = vrot.lane.b32.xlu0 %v956, 124
        %v968 = vpop.permute.xlu0 %967
        %vm969 = vcmask 1014784
        %v970 = vsel %vm969, %v962, %v964
        %v971 = vsel %vm969, %v966, %v968
        %v974 = vadd.f32 %v938, %v970
        %v975 = vadd.f32 %v939, %v971
        %s976 = scalar_lea.vmem %s447, 64 [#allocation5]
        %v977 = vld [vmem:[%s976] sm:$0xff]
        %v978 = vld [vmem:[%s976 + $0x8] sm:$0xff]
        %980 = vset.pattern.permute.xlu0 0
        %981 = vperm.xlu0 %980, %v977
        %v982 = vpop.permute.xlu0 %981
        %985 = vset.pattern.permute.xlu0 0
        %986 = vperm.xlu0 %985, %v978
        %v987 = vpop.permute.xlu0 %986
        %v989 = vmul.f32 %v982, %v689
        %v990 = vmul.f32 %v982, %v695
        %v991 = vmul.f32 %v987, %v690
        %v992 = vmul.f32 %v987, %v696
        %997 = vrot.lane.b32.xlu0 %v989, 124
        %v998 = vpop.permute.xlu0 %997
        %999 = vrot.lane.b32.xlu0 %v990, 124
        %v1000 = vpop.permute.xlu0 %999
        %1001 = vrot.lane.b32.xlu0 %v991, 124
        %v1002 = vpop.permute.xlu0 %1001
        %1003 = vrot.lane.b32.xlu0 %v992, 124
        %v1004 = vpop.permute.xlu0 %1003
        %v1005 = vsel %vm969, %v998, %v1000
        %v1006 = vsel %vm969, %v1002, %v1004
        %v1009 = vadd.f32 %v974, %v1005
        %v1010 = vadd.f32 %v975, %v1006
        %s1011 = scalar_lea.vmem %s440, 80 [#allocation4]
        %v1012 = vld [vmem:[%s1011] sm:$0xff]
        %v1013 = vld [vmem:[%s1011 + $0x8] sm:$0xff]
        %1015 = vset.pattern.permute.xlu0 0
        %1016 = vperm.xlu0 %1015, %v1012
        %v1017 = vpop.permute.xlu0 %1016
        %1020 = vset.pattern.permute.xlu0 0
        %1021 = vperm.xlu0 %1020, %v1013
        %v1022 = vpop.permute.xlu0 %1021
        %v1024 = vmul.f32 %v1017, %v631
        %v1025 = vmul.f32 %v1017, %v639
        %v1026 = vmul.f32 %v1022, %v632
        %v1027 = vmul.f32 %v1022, %v640
        %1032 = vrot.lane.b32.xlu0 %v1024, 123
        %v1033 = vpop.permute.xlu0 %1032
        %1034 = vrot.lane.b32.xlu0 %v1025, 123
        %v1035 = vpop.permute.xlu0 %1034
        %1036 = vrot.lane.b32.xlu0 %v1026, 123
        %v1037 = vpop.permute.xlu0 %1036
        %1038 = vrot.lane.b32.xlu0 %v1027, 123
        %v1039 = vpop.permute.xlu0 %1038
        %vm1040 = vcmask 1006592
        %v1041 = vsel %vm1040, %v1033, %v1035
        %v1042 = vsel %vm1040, %v1037, %v1039
        %v1045 = vadd.f32 %v1009, %v1041
        %v1046 = vadd.f32 %v1010, %v1042
        %s1047 = scalar_lea.vmem %s447, 80 [#allocation5]
        %v1048 = vld [vmem:[%s1047] sm:$0xff]
        %v1049 = vld [vmem:[%s1047 + $0x8] sm:$0xff]
        %1051 = vset.pattern.permute.xlu0 0
        %1052 = vperm.xlu0 %1051, %v1048
        %v1053 = vpop.permute.xlu0 %1052
        %1056 = vset.pattern.permute.xlu0 0
        %1057 = vperm.xlu0 %1056, %v1049
        %v1058 = vpop.permute.xlu0 %1057
        %v1060 = vmul.f32 %v1053, %v689
        %v1061 = vmul.f32 %v1053, %v695
        %v1062 = vmul.f32 %v1058, %v690
        %v1063 = vmul.f32 %v1058, %v696
        %1068 = vrot.lane.b32.xlu0 %v1060, 123
        %v1069 = vpop.permute.xlu0 %1068
        %1070 = vrot.lane.b32.xlu0 %v1061, 123
        %v1071 = vpop.permute.xlu0 %1070
        %1072 = vrot.lane.b32.xlu0 %v1062, 123
        %v1073 = vpop.permute.xlu0 %1072
        %1074 = vrot.lane.b32.xlu0 %v1063, 123
        %v1075 = vpop.permute.xlu0 %1074
        %v1076 = vsel %vm1040, %v1069, %v1071
        %v1077 = vsel %vm1040, %v1073, %v1075
        %v1080 = vadd.f32 %v1045, %v1076
        %v1081 = vadd.f32 %v1046, %v1077
        %s1082 = scalar_lea.vmem %s440, 96 [#allocation4]
        %v1083 = vld [vmem:[%s1082] sm:$0xff]
        %v1084 = vld [vmem:[%s1082 + $0x8] sm:$0xff]
        %1086 = vset.pattern.permute.xlu0 0
        %1087 = vperm.xlu0 %1086, %v1083
        %v1088 = vpop.permute.xlu0 %1087
        %1091 = vset.pattern.permute.xlu0 0
        %1092 = vperm.xlu0 %1091, %v1084
        %v1093 = vpop.permute.xlu0 %1092
        %v1095 = vmul.f32 %v1088, %v631
        %v1096 = vmul.f32 %v1088, %v639
        %v1097 = vmul.f32 %v1093, %v632
        %v1098 = vmul.f32 %v1093, %v640
        %1103 = vrot.lane.b32.xlu0 %v1095, 122
        %v1104 = vpop.permute.xlu0 %1103
        %1105 = vrot.lane.b32.xlu0 %v1096, 122
        %v1106 = vpop.permute.xlu0 %1105
        %1107 = vrot.lane.b32.xlu0 %v1097, 122
        %v1108 = vpop.permute.xlu0 %1107
        %1109 = vrot.lane.b32.xlu0 %v1098, 122
        %v1110 = vpop.permute.xlu0 %1109
        %vm1111 = vcmask 998400
        %v1112 = vsel %vm1111, %v1104, %v1106
        %v1113 = vsel %vm1111, %v1108, %v1110
        %v1116 = vadd.f32 %v1080, %v1112
        %v1117 = vadd.f32 %v1081, %v1113
        %s1118 = scalar_lea.vmem %s447, 96 [#allocation5]
        %v1119 = vld [vmem:[%s1118] sm:$0xff]
        %v1120 = vld [vmem:[%s1118 + $0x8] sm:$0xff]
        %1122 = vset.pattern.permute.xlu0 0
        %1123 = vperm.xlu0 %1122, %v1119
        %v1124 = vpop.permute.xlu0 %1123
        %1127 = vset.pattern.permute.xlu0 0
        %1128 = vperm.xlu0 %1127, %v1120
        %v1129 = vpop.permute.xlu0 %1128
        %v1131 = vmul.f32 %v1124, %v689
        %v1132 = vmul.f32 %v1124, %v695
        %v1133 = vmul.f32 %v1129, %v690
        %v1134 = vmul.f32 %v1129, %v696
        %1139 = vrot.lane.b32.xlu0 %v1131, 122
        %v1140 = vpop.permute.xlu0 %1139
        %1141 = vrot.lane.b32.xlu0 %v1132, 122
        %v1142 = vpop.permute.xlu0 %1141
        %1143 = vrot.lane.b32.xlu0 %v1133, 122
        %v1144 = vpop.permute.xlu0 %1143
        %1145 = vrot.lane.b32.xlu0 %v1134, 122
        %v1146 = vpop.permute.xlu0 %1145
        %v1147 = vsel %vm1111, %v1140, %v1142
        %v1148 = vsel %vm1111, %v1144, %v1146
        %v1151 = vadd.f32 %v1116, %v1147
        %v1152 = vadd.f32 %v1117, %v1148
        %v1153 = vld [vmem:[%s525] sm:$0xff]
        %v1154 = vld [vmem:[%s525 + $0x8] sm:$0xff]
        %1156 = vset.pattern.permute.xlu0 0
        %1157 = vperm.xlu0 %1156, %v1153
        %v1158 = vpop.permute.xlu0 %1157
        %1161 = vset.pattern.permute.xlu0 0
        %1162 = vperm.xlu0 %1161, %v1154
        %v1163 = vpop.permute.xlu0 %1162
        %v1165 = vadd.f32 %v1151, %v1158
        %v1166 = vadd.f32 %v1152, %v1163
        %1167 = vst [vmem:[%s498] sm:$0xff] %v1165
        %1168 = vst [vmem:[%s498 + $0x8] sm:$0xff] %v1166
        %s1169 = sand.u32 %s175, 1
        %s1170 = scalar_lea.sflag [#allocation7], %s1169
        %s1171 = sand.u32 %s175, 1
        %s1172 = smul.addr %s1171, 16
        %s1173 = scalar_lea.vmem [#allocation6], %s1172
        // Predicated region
        $region121: #{pixel_attention_snn.1} parent=107 // pred_check
          %p1174 = pneg %p185
        $region122: #{pixel_attention_snn.1} parent=107 // pred_check_branch
          %1176 = sbr.rel (%p1174) target = $region124
        $region123: #{pixel_attention_snn.1} parent=107 // pred_region
          %s1177 = smul.u32 2, %s23
          %s1179 = ssub.s32 256, 256
          %1180 = vsyncadd %s1170, %s1179
          %s1181 = smul.addr %s24, 4
          %s1182 = sadd.s32 %s1177, %s1181
          %s1183 = smul.addr %s1182, 128
          %s1184 = scalar_lea.hbm %s5, %s1183
          %s1185 = sshll.u32 %s1173, 4
          %s1186 = int_to_ptr.vmem [resolvable:$true] %s1185
          %1191 = dma.vmem_to_hbm [thread:$0]  %s1186, 256, %s1184, %s1170, 128, 128, 8
        $region124: #{pixel_attention_snn.1} parent=107 // pred_fallthru
          _
      $region108: #{pixel_attention_snn.1} parent=5 // pred_fallthru
        _
      %p1192 = scmp.le.s32.totalorder 2, %s14
      // Predicated region
      $region125: #{pixel_attention_snn.1} parent=5 // pred_check
        %p1193 = pneg %p1192
      $region126: #{pixel_attention_snn.1} parent=5 // pred_check_branch
        %1195 = sbr.rel (%p1193) target = $region128
      $region127: #{pixel_attention_snn.1} parent=5 // pred_region
        %s1196 = ssub.s32 %s14, 2
        // Predicated region
        $region129: #{pixel_attention_snn.1} parent=127 // pred_check
          %p1197 = pneg %p191
        $region130: #{pixel_attention_snn.1} parent=127 // pred_check_branch
          %1199 = sbr.rel (%p1197) target = $region132
        $region131: #{pixel_attention_snn.1} parent=127 // pred_region
          %s1200 = sand.u32 %s176, 1
          %s1201 = scalar_lea.sflag [#allocation7], %s1200
          %s1202 = sand.u32 %s176, 1
          %s1203 = smul.addr %s1202, 16
          %s1204 = scalar_lea.vmem [#allocation6], %s1203
          %1205 = dma.done %s1201, 256
        $region132: #{pixel_attention_snn.1} parent=127 // pred_fallthru
          _
      $region128: #{pixel_attention_snn.1} parent=5 // pred_fallthru
        _
    $region6: #{pixel_attention_snn.1} parent=1 // loop_footer
      %s18 = sadd.s32 1, %s14
    $region7: #{pixel_attention_snn.1} parent=1 // loop_footer_branch
      %13 = sbr.rel target = $region3
    $region8: #{pixel_attention_snn.1} parent=1 // loop_exit
      _
    %1206 = vsyncpa [#allocation7], 1
    %s1207 = scalar_lea.sflag [#allocation7], 1
    %1208 = vsyncpa %s1207, 1

</llo_original>
